<compile_context>
chip_gen: v7x
topology: tpu7x:2x2x1
jax: 0.10.0
libtpu: 0.0.40
codegen_flags: <defaults>
</compile_context>

<pallas_src>
import jax
import jax.numpy as jnp
from jax.experimental import pallas as pl
from jax.experimental.pallas import tpu as pltpu


def _se_conv1x1_kernel(x_ref, gate_ref, w_ref, o_ref):
    # sigmoid over a single lane-dense row (~10 vregs), broadcast over the P sublane rows.
    g = jax.nn.sigmoid(gate_ref[...])                  # (1, Cin)
    xg = x_ref[...] * g                                # (P, Cin), per-channel gate
    # MXU: (P, Cin) @ (Cin, Cout) -> (P, Cout); f32 accumulation, lane-dense store.
    o_ref[...] = jnp.dot(
        xg, w_ref[...], preferred_element_type=jnp.float32
    ).astype(o_ref.dtype)


def se_conv1x1(x_nchw, gate_nc11, w_oihw):
    """conv2d_1x1(x * sigmoid(gate)), no bias.

    x_nchw   : (N, Cin, H, W)    float32   (N must be 1, matching the module's usage)
    gate_nc11: (N, Cin, 1, 1)    float32
    w_oihw   : (Cout, Cin, 1, 1) float32
    returns  : (N, Cout, H, W)   float32
    """
    N, Cin, H, W = x_nchw.shape
    Cout = w_oihw.shape[0]
    assert N == 1, "SE gate broadcast is only valid for N == 1 (as in the module)"
    P = H * W

    # Channels-on-lanes operands. The x/w transposes are small XLA ops here; in the full
    # model the x transpose fuses into the producer and the weight transpose constant-folds.
    x_t = x_nchw.reshape(Cin, P).T            # (P, Cin)
    gate = gate_nc11.reshape(1, Cin)          # (1, Cin) lane-dense
    w_t = w_oihw.reshape(Cout, Cin).T         # (Cin, Cout)

    itemsize = 4  # f32
    cost = pl.CostEstimate(
        flops=2 * Cout * Cin * P,
        transcendentals=Cin,
        bytes_accessed=itemsize * (P * Cin + Cin + Cin * Cout + P * Cout),
    )

    # Total padded VMEM footprint ~3 MB -> single block, grid=(1,); K tiling / extra
    # buffering would only add per-step overhead on v6e/v7x.
    out_t = pl.pallas_call(
        _se_conv1x1_kernel,
        out_shape=jax.ShapeDtypeStruct((P, Cout), jnp.float32),
        grid_spec=pltpu.PrefetchScalarGridSpec(
            num_scalar_prefetch=0,
            grid=(1,),
            in_specs=[
                pl.BlockSpec((P, Cin), lambda i: (0, 0)),
                pl.BlockSpec((1, Cin), lambda i: (0, 0)),
                pl.BlockSpec((Cin, Cout), lambda i: (0, 0)),
            ],
            out_specs=pl.BlockSpec((P, Cout), lambda i: (0, 0)),
        ),
        compiler_params=pltpu.CompilerParams(
            dimension_semantics=("arbitrary",)
        ),
        cost_estimate=cost,
    )(x_t, gate, w_t)

    # (P, Cout) -> (1, Cout, H, W). Tiny (67 KB) transpose; a downstream consumer in the
    # real model would absorb it.
    return out_t.T.reshape(N, Cout, H, W)


def _reference(x_nchw, gate_nc11, w_oihw):
    g = jax.nn.sigmoid(gate_nc11)
    xg = x_nchw * g
    return jax.lax.conv_general_dilated(
        xg, w_oihw, window_strides=(1, 1), padding="VALID",
        dimension_numbers=("NCHW", "OIHW", "NCHW"),
    )


if __name__ == "__main__":
    # Shapes implied by the module: x463 (1,1200,7,7), x467 (1,1200,1,1),
    # conv2d157 weight (344,1200,1,1), no bias.
    key = jax.random.PRNGKey(0)
    k1, k2, k3 = jax.random.split(key, 3)

    N, Cin, H, W, Cout = 1, 1200, 7, 7, 344
    x463 = jax.random.normal(k1, (N, Cin, H, W), dtype=jnp.float32)
    x467 = jax.random.normal(k2, (N, Cin, 1, 1), dtype=jnp.float32)
    # Deterministic synthetic conv weight (Kaiming-ish scale).
    w = jax.random.normal(k3, (Cout, Cin, 1, 1), dtype=jnp.float32) * (1.0 / (Cin ** 0.5))

    out = se_conv1x1(x463, x467, w)
    out = jax.block_until_ready(out)

    ref = jax.block_until_ready(_reference(x463, x467, w))
    assert out.shape == (N, Cout, H, W), out.shape
    assert jnp.allclose(out, ref, atol=2e-4, rtol=2e-4), float(jnp.max(jnp.abs(out - ref)))

    print("KERNEL_OK")
</pallas_src>

<mosaic_0001>
module attributes {stable_mosaic.version = 11 : i64} {
  func.func @_se_conv1x1_kernel(%arg0: i32, %arg1: memref<49x1200xf32, #tpu.memory_space<vmem>>, %arg2: memref<1x1200xf32, #tpu.memory_space<vmem>>, %arg3: memref<1200x344xf32, #tpu.memory_space<vmem>>, %arg4: memref<49x344xf32, #tpu.memory_space<vmem>>) attributes {dimension_semantics = [#tpu.dimension_semantics<arbitrary>], iteration_bounds = array<i64: 1>, scalar_prefetch = 0 : i64, scratch_operands = 0 : i64, tpu.core_type = #tpu.core_type<tc>, window_params = [{pipeline_mode = #tpu.pipeline_mode<synchronous>, transform_indices = @transform_0, window_bounds = array<i64: 49, 1200>}, {pipeline_mode = #tpu.pipeline_mode<synchronous>, transform_indices = @transform_1, window_bounds = array<i64: 1, 1200>}, {pipeline_mode = #tpu.pipeline_mode<synchronous>, transform_indices = @transform_2, window_bounds = array<i64: 1200, 344>}, {pipeline_mode = #tpu.pipeline_mode<synchronous>, transform_indices = @transform_3, window_bounds = array<i64: 49, 344>}]} {
    %c0 = arith.constant 0 : index
    %c0_0 = arith.constant 0 : index
    %0 = vector.load %arg2[%c0, %c0_0] : memref<1x1200xf32, #tpu.memory_space<vmem>>, vector<1x1200xf32>
    %1 = arith.negf %0 : vector<1x1200xf32>
    %2 = math.exp %1 : vector<1x1200xf32>
    %cst = arith.constant 1.000000e+00 : f32
    %3 = vector.broadcast %cst : f32 to vector<1x1200xf32>
    %4 = arith.addf %3, %2 : vector<1x1200xf32>
    %5 = arith.divf %3, %4 : vector<1x1200xf32>
    %c0_1 = arith.constant 0 : index
    %c0_2 = arith.constant 0 : index
    %6 = vector.load %arg1[%c0_1, %c0_2] : memref<49x1200xf32, #tpu.memory_space<vmem>>, vector<49x1200xf32>
    %7 = vector.broadcast %5 : vector<1x1200xf32> to vector<49x1200xf32>
    %8 = arith.mulf %6, %7 : vector<49x1200xf32>
    %c0_3 = arith.constant 0 : index
    %c0_4 = arith.constant 0 : index
    %9 = vector.load %arg3[%c0_3, %c0_4] : memref<1200x344xf32, #tpu.memory_space<vmem>>, vector<1200x344xf32>
    %cst_5 = arith.constant dense<0.000000e+00> : vector<49x344xf32>
    %10 = tpu.matmul %8, %9, %cst_5 {dimension_numbers = #tpu.dot_dimension_numbers<[1], [0], [0], [1], [0, 0, 1, 1], [], []>} : vector<49x1200xf32>, vector<1200x344xf32>, vector<49x344xf32> -> vector<49x344xf32>
    %c0_6 = arith.constant 0 : index
    %c0_7 = arith.constant 0 : index
    %11 = vector.load %arg4[%c0_6, %c0_7] : memref<49x344xf32, #tpu.memory_space<vmem>>, vector<49x344xf32>
    tpu.vector_store %arg4[%c0_6, %c0_7], %10 {strides = array<i32>} : memref<49x344xf32, #tpu.memory_space<vmem>>, vector<49x344xf32>,
    return
  }
  func.func @transform_0(%arg0: i32) -> (i32, i32) {
    %c0_i32 = arith.constant 0 : i32
    %c0_i32_0 = arith.constant 0 : i32
    %c0_i32_1 = arith.constant 0 : i32
    return %c0_i32, %c0_i32_0 : i32, i32
  }
  func.func @transform_1(%arg0: i32) -> (i32, i32) {
    %c0_i32 = arith.constant 0 : i32
    %c0_i32_0 = arith.constant 0 : i32
    %c0_i32_1 = arith.constant 0 : i32
    return %c0_i32, %c0_i32_0 : i32, i32
  }
  func.func @transform_2(%arg0: i32) -> (i32, i32) {
    %c0_i32 = arith.constant 0 : i32
    %c0_i32_0 = arith.constant 0 : i32
    %c0_i32_1 = arith.constant 0 : i32
    return %c0_i32, %c0_i32_0 : i32, i32
  }
  func.func @transform_3(%arg0: i32) -> (i32, i32) {
    %c0_i32 = arith.constant 0 : i32
    %c0_i32_0 = arith.constant 0 : i32
    %c0_i32_1 = arith.constant 0 : i32
    return %c0_i32, %c0_i32_0 : i32, i32
  }
}

</mosaic_0001>

<llo_original>
// kernel: tpu_custom_call.1
$region0: #{tpu_custom_call.1}
  #allocation0 [shape = 'u32[]', space=smem, size = 0x4, offset = 0x4, fixed_abs, tag = 'smem constant byte address 0x4 - core index']
  #allocation1 [shape = 'u32[144,128]{1,0:T(1,128)}', space=vmem, size = 0x12000, scoped, tag = 'internal scratch']
  %s0 = inlined_call_operand.vmem [shape: f32[49,1200], index: 0, kind: input, shape index: {}]
  %s1 = inlined_call_operand.vmem [shape: f32[1,1200], index: 1, kind: input, shape index: {}]
  %s2 = inlined_call_operand.vmem [shape: f32[1200,344], index: 2, kind: input, shape index: {}]
  %s3 = inlined_call_operand.hbm [shape: f32[49,344], index: 3, kind: output, shape index: {}]
  %s4 = sld [smem:[#allocation0]]
  $region22: #{tpu_custom_call.1} parent=0
    _
  %s6 = ssub.s32 1, %s4
  %s7 = scalar_select 0, %s6, %s4
  $region1: #{tpu_custom_call.1} parent=0
    #allocation2 [shape = 'u8[86016]{0}', space=vmem, size = 0x15000, scoped, tag = 'output window, operand 0, single buffered']
    #allocation3 [shape = 's32[1]{0}', space=sflag, size = 0x4, scoped, tag = 'scoped memory for tpu_custom_call.1']
    %8 = vsyncpa [#allocation3], 0
    // Predicated region
    $region2: #{tpu_custom_call.1} parent=1 // pred_check
      _
    $region3: #{tpu_custom_call.1} parent=1 // pred_check_branch
      %10 = sbr.rel (0) target = $region5
    $region4: #{tpu_custom_call.1} parent=1 // pred_region
      _
    $region5: #{tpu_custom_call.1} parent=1 // pred_fallthru
      _
    // Predicated region
    $region6: #{tpu_custom_call.1} parent=1 // pred_check
      _
    $region7: #{tpu_custom_call.1} parent=1 // pred_check_branch
      %12 = sbr.rel (0) target = $region9
    $region8: #{tpu_custom_call.1} parent=1 // pred_region
      _
    $region9: #{tpu_custom_call.1} parent=1 // pred_fallthru
      _
    // Predicated region
    $region10: #{tpu_custom_call.1} parent=1 // pred_check
      _
    $region11: #{tpu_custom_call.1} parent=1 // pred_check_branch
      %14 = sbr.rel (0) target = $region13
    $region12: #{tpu_custom_call.1} parent=1 // pred_region
      _
    $region13: #{tpu_custom_call.1} parent=1 // pred_fallthru
      _
    %v15 = vld [vmem:[%s1] sm:$0xff]
    %v16 = vld [vmem:[%s1 + $0x8] sm:$0x3]
    %v17 = vxor.u32 %v15, 2147483648
    %v18 = vxor.u32 %v16, 2147483648
    %v19 = vmul.f32 %v17, 1.442695
    %v20 = vpow.pop %v19
    %v21 = vmul.f32 %v18, 1.442695
    %v22 = vpow.pop %v21
    %v23 = vadd.f32 %v20, 1.0
    %v24 = vadd.f32 %v22, 1.0
    %v25 = vrcp.pop %v23
    %v26 = vmul.f32 1.0, %v25
    %v27 = vrcp.pop %v24
    %v28 = vmul.f32 1.0, %v27
    %v29 = vld [vmem:[%s0] sm:$0xff]
    %v30 = vld [vmem:[%s0 + $0x8] sm:$0xff]
    %v31 = vld [vmem:[%s0 + $0x10] sm:$0xff]
    %v32 = vld [vmem:[%s0 + $0x18] sm:$0xff]
    %v33 = vld [vmem:[%s0 + $0x20] sm:$0xff]
    %v34 = vld [vmem:[%s0 + $0x28] sm:$0xff]
    %v35 = vld [vmem:[%s0 + $0x30] sm:$0xff]
    %v36 = vld [vmem:[%s0 + $0x38] sm:$0xff]
    %v37 = vld [vmem:[%s0 + $0x40] sm:$0xff]
    %v38 = vld [vmem:[%s0 + $0x48] sm:$0xff]
    %v39 = vld [vmem:[%s0 + $0x50] sm:$0xff]
    %v40 = vld [vmem:[%s0 + $0x58] sm:$0xff]
    %v41 = vld [vmem:[%s0 + $0x60] sm:$0xff]
    %v42 = vld [vmem:[%s0 + $0x68] sm:$0xff]
    %v43 = vld [vmem:[%s0 + $0x70] sm:$0xff]
    %v44 = vld [vmem:[%s0 + $0x78] sm:$0xff]
    %v45 = vld [vmem:[%s0 + $0x80] sm:$0xff]
    %v46 = vld [vmem:[%s0 + $0x88] sm:$0xff]
    %v47 = vld [vmem:[%s0 + $0x90] sm:$0xff]
    %v48 = vld [vmem:[%s0 + $0x98] sm:$0xff]
    %v49 = vld [vmem:[%s0 + $0xa0] sm:$0xff]
    %v50 = vld [vmem:[%s0 + $0xa8] sm:$0xff]
    %v51 = vld [vmem:[%s0 + $0xb0] sm:$0xff]
    %v52 = vld [vmem:[%s0 + $0xb8] sm:$0xff]
    %v53 = vld [vmem:[%s0 + $0xc0] sm:$0xff]
    %v54 = vld [vmem:[%s0 + $0xc8] sm:$0xff]
    %v55 = vld [vmem:[%s0 + $0xd0] sm:$0xff]
    %v56 = vld [vmem:[%s0 + $0xd8] sm:$0xff]
    %v57 = vld [vmem:[%s0 + $0xe0] sm:$0xff]
    %v58 = vld [vmem:[%s0 + $0xe8] sm:$0xff]
    %v59 = vld [vmem:[%s0 + $0xf0] sm:$0xff]
    %v60 = vld [vmem:[%s0 + $0xf8] sm:$0xff]
    %v61 = vld [vmem:[%s0 + $0x100] sm:$0xff]
    %v62 = vld [vmem:[%s0 + $0x108] sm:$0xff]
    %v63 = vld [vmem:[%s0 + $0x110] sm:$0xff]
    %v64 = vld [vmem:[%s0 + $0x118] sm:$0xff]
    %v65 = vld [vmem:[%s0 + $0x120] sm:$0xff]
    %v66 = vld [vmem:[%s0 + $0x128] sm:$0xff]
    %v67 = vld [vmem:[%s0 + $0x130] sm:$0xff]
    %v68 = vld [vmem:[%s0 + $0x138] sm:$0xff]
    %v69 = vld [vmem:[%s0 + $0x140] sm:$0xff]
    %v70 = vld [vmem:[%s0 + $0x148] sm:$0xff]
    %v71 = vld [vmem:[%s0 + $0x150] sm:$0xff]
    %v72 = vld [vmem:[%s0 + $0x158] sm:$0xff]
    %v73 = vld [vmem:[%s0 + $0x160] sm:$0xff]
    %v74 = vld [vmem:[%s0 + $0x168] sm:$0xff]
    %v75 = vld [vmem:[%s0 + $0x170] sm:$0xff]
    %v76 = vld [vmem:[%s0 + $0x178] sm:$0xff]
    %v77 = vld [vmem:[%s0 + $0x180] sm:$0xff]
    %v78 = vld [vmem:[%s0 + $0x188] sm:$0xff]
    %v79 = vld [vmem:[%s0 + $0x190] sm:$0xff]
    %v80 = vld [vmem:[%s0 + $0x198] sm:$0xff]
    %v81 = vld [vmem:[%s0 + $0x1a0] sm:$0xff]
    %v82 = vld [vmem:[%s0 + $0x1a8] sm:$0xff]
    %v83 = vld [vmem:[%s0 + $0x1b0] sm:$0xff]
    %v84 = vld [vmem:[%s0 + $0x1b8] sm:$0xff]
    %v85 = vld [vmem:[%s0 + $0x1c0] sm:$0xff]
    %v86 = vld [vmem:[%s0 + $0x1c8] sm:$0xff]
    %v87 = vld [vmem:[%s0 + $0x1d0] sm:$0xff]
    %v88 = vld [vmem:[%s0 + $0x1d8] sm:$0xff]
    %v89 = vld [vmem:[%s0 + $0x1e0] sm:$0x1]
    %v90 = vld [vmem:[%s0 + $0x1e8] sm:$0x1]
    %v91 = vld [vmem:[%s0 + $0x1f0] sm:$0x1]
    %v92 = vld [vmem:[%s0 + $0x1f8] sm:$0x1]
    %v93 = vld [vmem:[%s0 + $0x200] sm:$0x1]
    %v94 = vld [vmem:[%s0 + $0x208] sm:$0x1]
    %v95 = vld [vmem:[%s0 + $0x210] sm:$0x1]
    %v96 = vld [vmem:[%s0 + $0x218] sm:$0x1]
    %v97 = vld [vmem:[%s0 + $0x220] sm:$0x1]
    %v98 = vld [vmem:[%s0 + $0x228] sm:$0x1]
    %v101 = vlaneseq
    %v102 = vshrl.u32 %v101, 7
    %v103 = vsub.s32 0, %v102
    %v104 = vrot.slane %v26, %v103
    %v105 = vlaneseq
    %v106 = vshrl.u32 %v105, 7
    %v107 = vsub.s32 1, %v106
    %v108 = vrot.slane %v26, %v107
    %v109 = vlaneseq
    %v110 = vshrl.u32 %v109, 7
    %v111 = vsub.s32 2, %v110
    %v112 = vrot.slane %v26, %v111
    %v113 = vlaneseq
    %v114 = vshrl.u32 %v113, 7
    %v115 = vsub.s32 3, %v114
    %v116 = vrot.slane %v26, %v115
    %v117 = vlaneseq
    %v118 = vshrl.u32 %v117, 7
    %v119 = vsub.s32 4, %v118
    %v120 = vrot.slane %v26, %v119
    %v121 = vlaneseq
    %v122 = vshrl.u32 %v121, 7
    %v123 = vsub.s32 5, %v122
    %v124 = vrot.slane %v26, %v123
    %v125 = vlaneseq
    %v126 = vshrl.u32 %v125, 7
    %v127 = vsub.s32 6, %v126
    %v128 = vrot.slane %v26, %v127
    %v129 = vlaneseq
    %v130 = vshrl.u32 %v129, 7
    %v131 = vsub.s32 7, %v130
    %v132 = vrot.slane %v26, %v131
    %v133 = vlaneseq
    %v134 = vshrl.u32 %v133, 7
    %v135 = vsub.s32 0, %v134
    %v136 = vrot.slane %v28, %v135
    %v137 = vlaneseq
    %v138 = vshrl.u32 %v137, 7
    %v139 = vsub.s32 1, %v138
    %v140 = vrot.slane %v28, %v139
    %v151 = vmul.f32 %v29, %v104
    %v152 = vmul.f32 %v30, %v108
    %v153 = vmul.f32 %v31, %v112
    %v154 = vmul.f32 %v32, %v116
    %v155 = vmul.f32 %v33, %v120
    %v156 = vmul.f32 %v34, %v124
    %v157 = vmul.f32 %v35, %v128
    %v158 = vmul.f32 %v36, %v132
    %v159 = vmul.f32 %v37, %v136
    %v160 = vmul.f32 %v38, %v140
    %v161 = vmul.f32 %v39, %v104
    %v162 = vmul.f32 %v40, %v108
    %v163 = vmul.f32 %v41, %v112
    %v164 = vmul.f32 %v42, %v116
    %v165 = vmul.f32 %v43, %v120
    %v166 = vmul.f32 %v44, %v124
    %v167 = vmul.f32 %v45, %v128
    %v168 = vmul.f32 %v46, %v132
    %v169 = vmul.f32 %v47, %v136
    %v170 = vmul.f32 %v48, %v140
    %v171 = vmul.f32 %v49, %v104
    %v172 = vmul.f32 %v50, %v108
    %v173 = vmul.f32 %v51, %v112
    %v174 = vmul.f32 %v52, %v116
    %v175 = vmul.f32 %v53, %v120
    %v176 = vmul.f32 %v54, %v124
    %v177 = vmul.f32 %v55, %v128
    %v178 = vmul.f32 %v56, %v132
    %v179 = vmul.f32 %v57, %v136
    %v180 = vmul.f32 %v58, %v140
    %v181 = vmul.f32 %v59, %v104
    %v182 = vmul.f32 %v60, %v108
    %v183 = vmul.f32 %v61, %v112
    %v184 = vmul.f32 %v62, %v116
    %v185 = vmul.f32 %v63, %v120
    %v186 = vmul.f32 %v64, %v124
    %v187 = vmul.f32 %v65, %v128
    %v188 = vmul.f32 %v66, %v132
    %v189 = vmul.f32 %v67, %v136
    %v190 = vmul.f32 %v68, %v140
    %v191 = vmul.f32 %v69, %v104
    %v192 = vmul.f32 %v70, %v108
    %v193 = vmul.f32 %v71, %v112
    %v194 = vmul.f32 %v72, %v116
    %v195 = vmul.f32 %v73, %v120
    %v196 = vmul.f32 %v74, %v124
    %v197 = vmul.f32 %v75, %v128
    %v198 = vmul.f32 %v76, %v132
    %v199 = vmul.f32 %v77, %v136
    %v200 = vmul.f32 %v78, %v140
    %v201 = vmul.f32 %v79, %v104
    %v202 = vmul.f32 %v80, %v108
    %v203 = vmul.f32 %v81, %v112
    %v204 = vmul.f32 %v82, %v116
    %v205 = vmul.f32 %v83, %v120
    %v206 = vmul.f32 %v84, %v124
    %v207 = vmul.f32 %v85, %v128
    %v208 = vmul.f32 %v86, %v132
    %v209 = vmul.f32 %v87, %v136
    %v210 = vmul.f32 %v88, %v140
    %v211 = vmul.f32 %v89, %v104
    %v212 = vmul.f32 %v90, %v108
    %v213 = vmul.f32 %v91, %v112
    %v214 = vmul.f32 %v92, %v116
    %v215 = vmul.f32 %v93, %v120
    %v216 = vmul.f32 %v94, %v124
    %v217 = vmul.f32 %v95, %v128
    %v218 = vmul.f32 %v96, %v132
    %v219 = vmul.f32 %v97, %v136
    %v220 = vmul.f32 %v98, %v140
    %v221 = vld [vmem:[%s2] sm:$0xff]
    %v222 = vld [vmem:[%s2 + $0x8] sm:$0xff]
    %v223 = vld [vmem:[%s2 + $0x10] sm:$0xff]
    %v224 = vld [vmem:[%s2 + $0x18] sm:$0xff]
    %v225 = vld [vmem:[%s2 + $0x20] sm:$0xff]
    %v226 = vld [vmem:[%s2 + $0x28] sm:$0xff]
    %v227 = vld [vmem:[%s2 + $0x30] sm:$0xff]
    %v228 = vld [vmem:[%s2 + $0x38] sm:$0xff]
    %v229 = vld [vmem:[%s2 + $0x40] sm:$0xff]
    %v230 = vld [vmem:[%s2 + $0x48] sm:$0xff]
    %v231 = vld [vmem:[%s2 + $0x50] sm:$0xff]
    %v232 = vld [vmem:[%s2 + $0x58] sm:$0xff]
    %v233 = vld [vmem:[%s2 + $0x60] sm:$0xff]
    %v234 = vld [vmem:[%s2 + $0x68] sm:$0xff]
    %v235 = vld [vmem:[%s2 + $0x70] sm:$0xff]
    %v236 = vld [vmem:[%s2 + $0x78] sm:$0xff]
    %v237 = vld [vmem:[%s2 + $0x80] sm:$0xff]
    %v238 = vld [vmem:[%s2 + $0x88] sm:$0xff]
    %v239 = vld [vmem:[%s2 + $0x90] sm:$0xff]
    %v240 = vld [vmem:[%s2 + $0x98] sm:$0xff]
    %v241 = vld [vmem:[%s2 + $0xa0] sm:$0xff]
    %v242 = vld [vmem:[%s2 + $0xa8] sm:$0xff]
    %v243 = vld [vmem:[%s2 + $0xb0] sm:$0xff]
    %v244 = vld [vmem:[%s2 + $0xb8] sm:$0xff]
    %v245 = vld [vmem:[%s2 + $0xc0] sm:$0xff]
    %v246 = vld [vmem:[%s2 + $0xc8] sm:$0xff]
    %v247 = vld [vmem:[%s2 + $0xd0] sm:$0xff]
    %v248 = vld [vmem:[%s2 + $0xd8] sm:$0xff]
    %v249 = vld [vmem:[%s2 + $0xe0] sm:$0xff]
    %v250 = vld [vmem:[%s2 + $0xe8] sm:$0xff]
    %v251 = vld [vmem:[%s2 + $0xf0] sm:$0xff]
    %v252 = vld [vmem:[%s2 + $0xf8] sm:$0xff]
    %v253 = vld [vmem:[%s2 + $0x100] sm:$0xff]
    %v254 = vld [vmem:[%s2 + $0x108] sm:$0xff]
    %v255 = vld [vmem:[%s2 + $0x110] sm:$0xff]
    %v256 = vld [vmem:[%s2 + $0x118] sm:$0xff]
    %v257 = vld [vmem:[%s2 + $0x120] sm:$0xff]
    %v258 = vld [vmem:[%s2 + $0x128] sm:$0xff]
    %v259 = vld [vmem:[%s2 + $0x130] sm:$0xff]
    %v260 = vld [vmem:[%s2 + $0x138] sm:$0xff]
    %v261 = vld [vmem:[%s2 + $0x140] sm:$0xff]
    %v262 = vld [vmem:[%s2 + $0x148] sm:$0xff]
    %v263 = vld [vmem:[%s2 + $0x150] sm:$0xff]
    %v264 = vld [vmem:[%s2 + $0x158] sm:$0xff]
    %v265 = vld [vmem:[%s2 + $0x160] sm:$0xff]
    %v266 = vld [vmem:[%s2 + $0x168] sm:$0xff]
    %v267 = vld [vmem:[%s2 + $0x170] sm:$0xff]
    %v268 = vld [vmem:[%s2 + $0x178] sm:$0xff]
    %v269 = vld [vmem:[%s2 + $0x180] sm:$0xff]
    %v270 = vld [vmem:[%s2 + $0x188] sm:$0xff]
    %v271 = vld [vmem:[%s2 + $0x190] sm:$0xff]
    %v272 = vld [vmem:[%s2 + $0x198] sm:$0xff]
    %v273 = vld [vmem:[%s2 + $0x1a0] sm:$0xff]
    %v274 = vld [vmem:[%s2 + $0x1a8] sm:$0xff]
    %v275 = vld [vmem:[%s2 + $0x1b0] sm:$0xff]
    %v276 = vld [vmem:[%s2 + $0x1b8] sm:$0xff]
    %v277 = vld [vmem:[%s2 + $0x1c0] sm:$0xff]
    %v278 = vld [vmem:[%s2 + $0x1c8] sm:$0xff]
    %v279 = vld [vmem:[%s2 + $0x1d0] sm:$0xff]
    %v280 = vld [vmem:[%s2 + $0x1d8] sm:$0xff]
    %v281 = vld [vmem:[%s2 + $0x1e0] sm:$0xff]
    %v282 = vld [vmem:[%s2 + $0x1e8] sm:$0xff]
    %v283 = vld [vmem:[%s2 + $0x1f0] sm:$0xff]
    %v284 = vld [vmem:[%s2 + $0x1f8] sm:$0xff]
    %v285 = vld [vmem:[%s2 + $0x200] sm:$0xff]
    %v286 = vld [vmem:[%s2 + $0x208] sm:$0xff]
    %v287 = vld [vmem:[%s2 + $0x210] sm:$0xff]
    %v288 = vld [vmem:[%s2 + $0x218] sm:$0xff]
    %v289 = vld [vmem:[%s2 + $0x220] sm:$0xff]
    %v290 = vld [vmem:[%s2 + $0x228] sm:$0xff]
    %v291 = vld [vmem:[%s2 + $0x230] sm:$0xff]
    %v292 = vld [vmem:[%s2 + $0x238] sm:$0xff]
    %v293 = vld [vmem:[%s2 + $0x240] sm:$0xff]
    %v294 = vld [vmem:[%s2 + $0x248] sm:$0xff]
    %v295 = vld [vmem:[%s2 + $0x250] sm:$0xff]
    %v296 = vld [vmem:[%s2 + $0x258] sm:$0xff]
    %v297 = vld [vmem:[%s2 + $0x260] sm:$0xff]
    %v298 = vld [vmem:[%s2 + $0x268] sm:$0xff]
    %v299 = vld [vmem:[%s2 + $0x270] sm:$0xff]
    %v300 = vld [vmem:[%s2 + $0x278] sm:$0xff]
    %v301 = vld [vmem:[%s2 + $0x280] sm:$0xff]
    %v302 = vld [vmem:[%s2 + $0x288] sm:$0xff]
    %v303 = vld [vmem:[%s2 + $0x290] sm:$0xff]
    %v304 = vld [vmem:[%s2 + $0x298] sm:$0xff]
    %v305 = vld [vmem:[%s2 + $0x2a0] sm:$0xff]
    %v306 = vld [vmem:[%s2 + $0x2a8] sm:$0xff]
    %v307 = vld [vmem:[%s2 + $0x2b0] sm:$0xff]
    %v308 = vld [vmem:[%s2 + $0x2b8] sm:$0xff]
    %v309 = vld [vmem:[%s2 + $0x2c0] sm:$0xff]
    %v310 = vld [vmem:[%s2 + $0x2c8] sm:$0xff]
    %v311 = vld [vmem:[%s2 + $0x2d0] sm:$0xff]
    %v312 = vld [vmem:[%s2 + $0x2d8] sm:$0xff]
    %v313 = vld [vmem:[%s2 + $0x2e0] sm:$0xff]
    %v314 = vld [vmem:[%s2 + $0x2e8] sm:$0xff]
    %v315 = vld [vmem:[%s2 + $0x2f0] sm:$0xff]
    %v316 = vld [vmem:[%s2 + $0x2f8] sm:$0xff]
    %v317 = vld [vmem:[%s2 + $0x300] sm:$0xff]
    %v318 = vld [vmem:[%s2 + $0x308] sm:$0xff]
    %v319 = vld [vmem:[%s2 + $0x310] sm:$0xff]
    %v320 = vld [vmem:[%s2 + $0x318] sm:$0xff]
    %v321 = vld [vmem:[%s2 + $0x320] sm:$0xff]
    %v322 = vld [vmem:[%s2 + $0x328] sm:$0xff]
    %v323 = vld [vmem:[%s2 + $0x330] sm:$0xff]
    %v324 = vld [vmem:[%s2 + $0x338] sm:$0xff]
    %v325 = vld [vmem:[%s2 + $0x340] sm:$0xff]
    %v326 = vld [vmem:[%s2 + $0x348] sm:$0xff]
    %v327 = vld [vmem:[%s2 + $0x350] sm:$0xff]
    %v328 = vld [vmem:[%s2 + $0x358] sm:$0xff]
    %v329 = vld [vmem:[%s2 + $0x360] sm:$0xff]
    %v330 = vld [vmem:[%s2 + $0x368] sm:$0xff]
    %v331 = vld [vmem:[%s2 + $0x370] sm:$0xff]
    %v332 = vld [vmem:[%s2 + $0x378] sm:$0xff]
    %v333 = vld [vmem:[%s2 + $0x380] sm:$0xff]
    %v334 = vld [vmem:[%s2 + $0x388] sm:$0xff]
    %v335 = vld [vmem:[%s2 + $0x390] sm:$0xff]
    %v336 = vld [vmem:[%s2 + $0x398] sm:$0xff]
    %v337 = vld [vmem:[%s2 + $0x3a0] sm:$0xff]
    %v338 = vld [vmem:[%s2 + $0x3a8] sm:$0xff]
    %v339 = vld [vmem:[%s2 + $0x3b0] sm:$0xff]
    %v340 = vld [vmem:[%s2 + $0x3b8] sm:$0xff]
    %v341 = vld [vmem:[%s2 + $0x3c0] sm:$0xff]
    %v342 = vld [vmem:[%s2 + $0x3c8] sm:$0xff]
    %v343 = vld [vmem:[%s2 + $0x3d0] sm:$0xff]
    %v344 = vld [vmem:[%s2 + $0x3d8] sm:$0xff]
    %v345 = vld [vmem:[%s2 + $0x3e0] sm:$0xff]
    %v346 = vld [vmem:[%s2 + $0x3e8] sm:$0xff]
    %v347 = vld [vmem:[%s2 + $0x3f0] sm:$0xff]
    %v348 = vld [vmem:[%s2 + $0x3f8] sm:$0xff]
    %v349 = vld [vmem:[%s2 + $0x400] sm:$0xff]
    %v350 = vld [vmem:[%s2 + $0x408] sm:$0xff]
    %v351 = vld [vmem:[%s2 + $0x410] sm:$0xff]
    %v352 = vld [vmem:[%s2 + $0x418] sm:$0xff]
    %v353 = vld [vmem:[%s2 + $0x420] sm:$0xff]
    %v354 = vld [vmem:[%s2 + $0x428] sm:$0xff]
    %v355 = vld [vmem:[%s2 + $0x430] sm:$0xff]
    %v356 = vld [vmem:[%s2 + $0x438] sm:$0xff]
    %v357 = vld [vmem:[%s2 + $0x440] sm:$0xff]
    %v358 = vld [vmem:[%s2 + $0x448] sm:$0xff]
    %v359 = vld [vmem:[%s2 + $0x450] sm:$0xff]
    %v360 = vld [vmem:[%s2 + $0x458] sm:$0xff]
    %v361 = vld [vmem:[%s2 + $0x460] sm:$0xff]
    %v362 = vld [vmem:[%s2 + $0x468] sm:$0xff]
    %v363 = vld [vmem:[%s2 + $0x470] sm:$0xff]
    %v364 = vld [vmem:[%s2 + $0x478] sm:$0xff]
    %v365 = vld [vmem:[%s2 + $0x480] sm:$0xff]
    %v366 = vld [vmem:[%s2 + $0x488] sm:$0xff]
    %v367 = vld [vmem:[%s2 + $0x490] sm:$0xff]
    %v368 = vld [vmem:[%s2 + $0x498] sm:$0xff]
    %v369 = vld [vmem:[%s2 + $0x4a0] sm:$0xff]
    %v370 = vld [vmem:[%s2 + $0x4a8] sm:$0xff]
    %v371 = vld [vmem:[%s2 + $0x4b0] sm:$0xff]
    %v372 = vld [vmem:[%s2 + $0x4b8] sm:$0xff]
    %v373 = vld [vmem:[%s2 + $0x4c0] sm:$0xff]
    %v374 = vld [vmem:[%s2 + $0x4c8] sm:$0xff]
    %v375 = vld [vmem:[%s2 + $0x4d0] sm:$0xff]
    %v376 = vld [vmem:[%s2 + $0x4d8] sm:$0xff]
    %v377 = vld [vmem:[%s2 + $0x4e0] sm:$0xff]
    %v378 = vld [vmem:[%s2 + $0x4e8] sm:$0xff]
    %v379 = vld [vmem:[%s2 + $0x4f0] sm:$0xff]
    %v380 = vld [vmem:[%s2 + $0x4f8] sm:$0xff]
    %v381 = vld [vmem:[%s2 + $0x500] sm:$0xff]
    %v382 = vld [vmem:[%s2 + $0x508] sm:$0xff]
    %v383 = vld [vmem:[%s2 + $0x510] sm:$0xff]
    %v384 = vld [vmem:[%s2 + $0x518] sm:$0xff]
    %v385 = vld [vmem:[%s2 + $0x520] sm:$0xff]
    %v386 = vld [vmem:[%s2 + $0x528] sm:$0xff]
    %v387 = vld [vmem:[%s2 + $0x530] sm:$0xff]
    %v388 = vld [vmem:[%s2 + $0x538] sm:$0xff]
    %v389 = vld [vmem:[%s2 + $0x540] sm:$0xff]
    %v390 = vld [vmem:[%s2 + $0x548] sm:$0xff]
    %v391 = vld [vmem:[%s2 + $0x550] sm:$0xff]
    %v392 = vld [vmem:[%s2 + $0x558] sm:$0xff]
    %v393 = vld [vmem:[%s2 + $0x560] sm:$0xff]
    %v394 = vld [vmem:[%s2 + $0x568] sm:$0xff]
    %v395 = vld [vmem:[%s2 + $0x570] sm:$0xff]
    %v396 = vld [vmem:[%s2 + $0x578] sm:$0xff]
    %v397 = vld [vmem:[%s2 + $0x580] sm:$0xff]
    %v398 = vld [vmem:[%s2 + $0x588] sm:$0xff]
    %v399 = vld [vmem:[%s2 + $0x590] sm:$0xff]
    %v400 = vld [vmem:[%s2 + $0x598] sm:$0xff]
    %v401 = vld [vmem:[%s2 + $0x5a0] sm:$0xff]
    %v402 = vld [vmem:[%s2 + $0x5a8] sm:$0xff]
    %v403 = vld [vmem:[%s2 + $0x5b0] sm:$0xff]
    %v404 = vld [vmem:[%s2 + $0x5b8] sm:$0xff]
    %v405 = vld [vmem:[%s2 + $0x5c0] sm:$0xff]
    %v406 = vld [vmem:[%s2 + $0x5c8] sm:$0xff]
    %v407 = vld [vmem:[%s2 + $0x5d0] sm:$0xff]
    %v408 = vld [vmem:[%s2 + $0x5d8] sm:$0xff]
    %v409 = vld [vmem:[%s2 + $0x5e0] sm:$0xff]
    %v410 = vld [vmem:[%s2 + $0x5e8] sm:$0xff]
    %v411 = vld [vmem:[%s2 + $0x5f0] sm:$0xff]
    %v412 = vld [vmem:[%s2 + $0x5f8] sm:$0xff]
    %v413 = vld [vmem:[%s2 + $0x600] sm:$0xff]
    %v414 = vld [vmem:[%s2 + $0x608] sm:$0xff]
    %v415 = vld [vmem:[%s2 + $0x610] sm:$0xff]
    %v416 = vld [vmem:[%s2 + $0x618] sm:$0xff]
    %v417 = vld [vmem:[%s2 + $0x620] sm:$0xff]
    %v418 = vld [vmem:[%s2 + $0x628] sm:$0xff]
    %v419 = vld [vmem:[%s2 + $0x630] sm:$0xff]
    %v420 = vld [vmem:[%s2 + $0x638] sm:$0xff]
    %v421 = vld [vmem:[%s2 + $0x640] sm:$0xff]
    %v422 = vld [vmem:[%s2 + $0x648] sm:$0xff]
    %v423 = vld [vmem:[%s2 + $0x650] sm:$0xff]
    %v424 = vld [vmem:[%s2 + $0x658] sm:$0xff]
    %v425 = vld [vmem:[%s2 + $0x660] sm:$0xff]
    %v426 = vld [vmem:[%s2 + $0x668] sm:$0xff]
    %v427 = vld [vmem:[%s2 + $0x670] sm:$0xff]
    %v428 = vld [vmem:[%s2 + $0x678] sm:$0xff]
    %v429 = vld [vmem:[%s2 + $0x680] sm:$0xff]
    %v430 = vld [vmem:[%s2 + $0x688] sm:$0xff]
    %v431 = vld [vmem:[%s2 + $0x690] sm:$0xff]
    %v432 = vld [vmem:[%s2 + $0x698] sm:$0xff]
    %v433 = vld [vmem:[%s2 + $0x6a0] sm:$0xff]
    %v434 = vld [vmem:[%s2 + $0x6a8] sm:$0xff]
    %v435 = vld [vmem:[%s2 + $0x6b0] sm:$0xff]
    %v436 = vld [vmem:[%s2 + $0x6b8] sm:$0xff]
    %v437 = vld [vmem:[%s2 + $0x6c0] sm:$0xff]
    %v438 = vld [vmem:[%s2 + $0x6c8] sm:$0xff]
    %v439 = vld [vmem:[%s2 + $0x6d0] sm:$0xff]
    %v440 = vld [vmem:[%s2 + $0x6d8] sm:$0xff]
    %v441 = vld [vmem:[%s2 + $0x6e0] sm:$0xff]
    %v442 = vld [vmem:[%s2 + $0x6e8] sm:$0xff]
    %v443 = vld [vmem:[%s2 + $0x6f0] sm:$0xff]
    %v444 = vld [vmem:[%s2 + $0x6f8] sm:$0xff]
    %v445 = vld [vmem:[%s2 + $0x700] sm:$0xff]
    %v446 = vld [vmem:[%s2 + $0x708] sm:$0xff]
    %v447 = vld [vmem:[%s2 + $0x710] sm:$0xff]
    %v448 = vld [vmem:[%s2 + $0x718] sm:$0xff]
    %v449 = vld [vmem:[%s2 + $0x720] sm:$0xff]
    %v450 = vld [vmem:[%s2 + $0x728] sm:$0xff]
    %v451 = vld [vmem:[%s2 + $0x730] sm:$0xff]
    %v452 = vld [vmem:[%s2 + $0x738] sm:$0xff]
    %v453 = vld [vmem:[%s2 + $0x740] sm:$0xff]
    %v454 = vld [vmem:[%s2 + $0x748] sm:$0xff]
    %v455 = vld [vmem:[%s2 + $0x750] sm:$0xff]
    %v456 = vld [vmem:[%s2 + $0x758] sm:$0xff]
    %v457 = vld [vmem:[%s2 + $0x760] sm:$0xff]
    %v458 = vld [vmem:[%s2 + $0x768] sm:$0xff]
    %v459 = vld [vmem:[%s2 + $0x770] sm:$0xff]
    %v460 = vld [vmem:[%s2 + $0x778] sm:$0xff]
    %v461 = vld [vmem:[%s2 + $0x780] sm:$0xff]
    %v462 = vld [vmem:[%s2 + $0x788] sm:$0xff]
    %v463 = vld [vmem:[%s2 + $0x790] sm:$0xff]
    %v464 = vld [vmem:[%s2 + $0x798] sm:$0xff]
    %v465 = vld [vmem:[%s2 + $0x7a0] sm:$0xff]
    %v466 = vld [vmem:[%s2 + $0x7a8] sm:$0xff]
    %v467 = vld [vmem:[%s2 + $0x7b0] sm:$0xff]
    %v468 = vld [vmem:[%s2 + $0x7b8] sm:$0xff]
    %v469 = vld [vmem:[%s2 + $0x7c0] sm:$0xff]
    %v470 = vld [vmem:[%s2 + $0x7c8] sm:$0xff]
    %v471 = vld [vmem:[%s2 + $0x7d0] sm:$0xff]
    %v472 = vld [vmem:[%s2 + $0x7d8] sm:$0xff]
    %v473 = vld [vmem:[%s2 + $0x7e0] sm:$0xff]
    %v474 = vld [vmem:[%s2 + $0x7e8] sm:$0xff]
    %v475 = vld [vmem:[%s2 + $0x7f0] sm:$0xff]
    %v476 = vld [vmem:[%s2 + $0x7f8] sm:$0xff]
    %v477 = vld [vmem:[%s2 + $0x800] sm:$0xff]
    %v478 = vld [vmem:[%s2 + $0x808] sm:$0xff]
    %v479 = vld [vmem:[%s2 + $0x810] sm:$0xff]
    %v480 = vld [vmem:[%s2 + $0x818] sm:$0xff]
    %v481 = vld [vmem:[%s2 + $0x820] sm:$0xff]
    %v482 = vld [vmem:[%s2 + $0x828] sm:$0xff]
    %v483 = vld [vmem:[%s2 + $0x830] sm:$0xff]
    %v484 = vld [vmem:[%s2 + $0x838] sm:$0xff]
    %v485 = vld [vmem:[%s2 + $0x840] sm:$0xff]
    %v486 = vld [vmem:[%s2 + $0x848] sm:$0xff]
    %v487 = vld [vmem:[%s2 + $0x850] sm:$0xff]
    %v488 = vld [vmem:[%s2 + $0x858] sm:$0xff]
    %v489 = vld [vmem:[%s2 + $0x860] sm:$0xff]
    %v490 = vld [vmem:[%s2 + $0x868] sm:$0xff]
    %v491 = vld [vmem:[%s2 + $0x870] sm:$0xff]
    %v492 = vld [vmem:[%s2 + $0x878] sm:$0xff]
    %v493 = vld [vmem:[%s2 + $0x880] sm:$0xff]
    %v494 = vld [vmem:[%s2 + $0x888] sm:$0xff]
    %v495 = vld [vmem:[%s2 + $0x890] sm:$0xff]
    %v496 = vld [vmem:[%s2 + $0x898] sm:$0xff]
    %v497 = vld [vmem:[%s2 + $0x8a0] sm:$0xff]
    %v498 = vld [vmem:[%s2 + $0x8a8] sm:$0xff]
    %v499 = vld [vmem:[%s2 + $0x8b0] sm:$0xff]
    %v500 = vld [vmem:[%s2 + $0x8b8] sm:$0xff]
    %v501 = vld [vmem:[%s2 + $0x8c0] sm:$0xff]
    %v502 = vld [vmem:[%s2 + $0x8c8] sm:$0xff]
    %v503 = vld [vmem:[%s2 + $0x8d0] sm:$0xff]
    %v504 = vld [vmem:[%s2 + $0x8d8] sm:$0xff]
    %v505 = vld [vmem:[%s2 + $0x8e0] sm:$0xff]
    %v506 = vld [vmem:[%s2 + $0x8e8] sm:$0xff]
    %v507 = vld [vmem:[%s2 + $0x8f0] sm:$0xff]
    %v508 = vld [vmem:[%s2 + $0x8f8] sm:$0xff]
    %v509 = vld [vmem:[%s2 + $0x900] sm:$0xff]
    %v510 = vld [vmem:[%s2 + $0x908] sm:$0xff]
    %v511 = vld [vmem:[%s2 + $0x910] sm:$0xff]
    %v512 = vld [vmem:[%s2 + $0x918] sm:$0xff]
    %v513 = vld [vmem:[%s2 + $0x920] sm:$0xff]
    %v514 = vld [vmem:[%s2 + $0x928] sm:$0xff]
    %v515 = vld [vmem:[%s2 + $0x930] sm:$0xff]
    %v516 = vld [vmem:[%s2 + $0x938] sm:$0xff]
    %v517 = vld [vmem:[%s2 + $0x940] sm:$0xff]
    %v518 = vld [vmem:[%s2 + $0x948] sm:$0xff]
    %v519 = vld [vmem:[%s2 + $0x950] sm:$0xff]
    %v520 = vld [vmem:[%s2 + $0x958] sm:$0xff]
    %v521 = vld [vmem:[%s2 + $0x960] sm:$0xff]
    %v522 = vld [vmem:[%s2 + $0x968] sm:$0xff]
    %v523 = vld [vmem:[%s2 + $0x970] sm:$0xff]
    %v524 = vld [vmem:[%s2 + $0x978] sm:$0xff]
    %v525 = vld [vmem:[%s2 + $0x980] sm:$0xff]
    %v526 = vld [vmem:[%s2 + $0x988] sm:$0xff]
    %v527 = vld [vmem:[%s2 + $0x990] sm:$0xff]
    %v528 = vld [vmem:[%s2 + $0x998] sm:$0xff]
    %v529 = vld [vmem:[%s2 + $0x9a0] sm:$0xff]
    %v530 = vld [vmem:[%s2 + $0x9a8] sm:$0xff]
    %v531 = vld [vmem:[%s2 + $0x9b0] sm:$0xff]
    %v532 = vld [vmem:[%s2 + $0x9b8] sm:$0xff]
    %v533 = vld [vmem:[%s2 + $0x9c0] sm:$0xff]
    %v534 = vld [vmem:[%s2 + $0x9c8] sm:$0xff]
    %v535 = vld [vmem:[%s2 + $0x9d0] sm:$0xff]
    %v536 = vld [vmem:[%s2 + $0x9d8] sm:$0xff]
    %v537 = vld [vmem:[%s2 + $0x9e0] sm:$0xff]
    %v538 = vld [vmem:[%s2 + $0x9e8] sm:$0xff]
    %v539 = vld [vmem:[%s2 + $0x9f0] sm:$0xff]
    %v540 = vld [vmem:[%s2 + $0x9f8] sm:$0xff]
    %v541 = vld [vmem:[%s2 + $0xa00] sm:$0xff]
    %v542 = vld [vmem:[%s2 + $0xa08] sm:$0xff]
    %v543 = vld [vmem:[%s2 + $0xa10] sm:$0xff]
    %v544 = vld [vmem:[%s2 + $0xa18] sm:$0xff]
    %v545 = vld [vmem:[%s2 + $0xa20] sm:$0xff]
    %v546 = vld [vmem:[%s2 + $0xa28] sm:$0xff]
    %v547 = vld [vmem:[%s2 + $0xa30] sm:$0xff]
    %v548 = vld [vmem:[%s2 + $0xa38] sm:$0xff]
    %v549 = vld [vmem:[%s2 + $0xa40] sm:$0xff]
    %v550 = vld [vmem:[%s2 + $0xa48] sm:$0xff]
    %v551 = vld [vmem:[%s2 + $0xa50] sm:$0xff]
    %v552 = vld [vmem:[%s2 + $0xa58] sm:$0xff]
    %v553 = vld [vmem:[%s2 + $0xa60] sm:$0xff]
    %v554 = vld [vmem:[%s2 + $0xa68] sm:$0xff]
    %v555 = vld [vmem:[%s2 + $0xa70] sm:$0xff]
    %v556 = vld [vmem:[%s2 + $0xa78] sm:$0xff]
    %v557 = vld [vmem:[%s2 + $0xa80] sm:$0xff]
    %v558 = vld [vmem:[%s2 + $0xa88] sm:$0xff]
    %v559 = vld [vmem:[%s2 + $0xa90] sm:$0xff]
    %v560 = vld [vmem:[%s2 + $0xa98] sm:$0xff]
    %v561 = vld [vmem:[%s2 + $0xaa0] sm:$0xff]
    %v562 = vld [vmem:[%s2 + $0xaa8] sm:$0xff]
    %v563 = vld [vmem:[%s2 + $0xab0] sm:$0xff]
    %v564 = vld [vmem:[%s2 + $0xab8] sm:$0xff]
    %v565 = vld [vmem:[%s2 + $0xac0] sm:$0xff]
    %v566 = vld [vmem:[%s2 + $0xac8] sm:$0xff]
    %v567 = vld [vmem:[%s2 + $0xad0] sm:$0xff]
    %v568 = vld [vmem:[%s2 + $0xad8] sm:$0xff]
    %v569 = vld [vmem:[%s2 + $0xae0] sm:$0xff]
    %v570 = vld [vmem:[%s2 + $0xae8] sm:$0xff]
    %v571 = vld [vmem:[%s2 + $0xaf0] sm:$0xff]
    %v572 = vld [vmem:[%s2 + $0xaf8] sm:$0xff]
    %v573 = vld [vmem:[%s2 + $0xb00] sm:$0xff]
    %v574 = vld [vmem:[%s2 + $0xb08] sm:$0xff]
    %v575 = vld [vmem:[%s2 + $0xb10] sm:$0xff]
    %v576 = vld [vmem:[%s2 + $0xb18] sm:$0xff]
    %v577 = vld [vmem:[%s2 + $0xb20] sm:$0xff]
    %v578 = vld [vmem:[%s2 + $0xb28] sm:$0xff]
    %v579 = vld [vmem:[%s2 + $0xb30] sm:$0xff]
    %v580 = vld [vmem:[%s2 + $0xb38] sm:$0xff]
    %v581 = vld [vmem:[%s2 + $0xb40] sm:$0xff]
    %v582 = vld [vmem:[%s2 + $0xb48] sm:$0xff]
    %v583 = vld [vmem:[%s2 + $0xb50] sm:$0xff]
    %v584 = vld [vmem:[%s2 + $0xb58] sm:$0xff]
    %v585 = vld [vmem:[%s2 + $0xb60] sm:$0xff]
    %v586 = vld [vmem:[%s2 + $0xb68] sm:$0xff]
    %v587 = vld [vmem:[%s2 + $0xb70] sm:$0xff]
    %v588 = vld [vmem:[%s2 + $0xb78] sm:$0xff]
    %v589 = vld [vmem:[%s2 + $0xb80] sm:$0xff]
    %v590 = vld [vmem:[%s2 + $0xb88] sm:$0xff]
    %v591 = vld [vmem:[%s2 + $0xb90] sm:$0xff]
    %v592 = vld [vmem:[%s2 + $0xb98] sm:$0xff]
    %v593 = vld [vmem:[%s2 + $0xba0] sm:$0xff]
    %v594 = vld [vmem:[%s2 + $0xba8] sm:$0xff]
    %v595 = vld [vmem:[%s2 + $0xbb0] sm:$0xff]
    %v596 = vld [vmem:[%s2 + $0xbb8] sm:$0xff]
    %v597 = vld [vmem:[%s2 + $0xbc0] sm:$0xff]
    %v598 = vld [vmem:[%s2 + $0xbc8] sm:$0xff]
    %v599 = vld [vmem:[%s2 + $0xbd0] sm:$0xff]
    %v600 = vld [vmem:[%s2 + $0xbd8] sm:$0xff]
    %v601 = vld [vmem:[%s2 + $0xbe0] sm:$0xff]
    %v602 = vld [vmem:[%s2 + $0xbe8] sm:$0xff]
    %v603 = vld [vmem:[%s2 + $0xbf0] sm:$0xff]
    %v604 = vld [vmem:[%s2 + $0xbf8] sm:$0xff]
    %v605 = vld [vmem:[%s2 + $0xc00] sm:$0xff]
    %v606 = vld [vmem:[%s2 + $0xc08] sm:$0xff]
    %v607 = vld [vmem:[%s2 + $0xc10] sm:$0xff]
    %v608 = vld [vmem:[%s2 + $0xc18] sm:$0xff]
    %v609 = vld [vmem:[%s2 + $0xc20] sm:$0xff]
    %v610 = vld [vmem:[%s2 + $0xc28] sm:$0xff]
    %v611 = vld [vmem:[%s2 + $0xc30] sm:$0xff]
    %v612 = vld [vmem:[%s2 + $0xc38] sm:$0xff]
    %v613 = vld [vmem:[%s2 + $0xc40] sm:$0xff]
    %v614 = vld [vmem:[%s2 + $0xc48] sm:$0xff]
    %v615 = vld [vmem:[%s2 + $0xc50] sm:$0xff]
    %v616 = vld [vmem:[%s2 + $0xc58] sm:$0xff]
    %v617 = vld [vmem:[%s2 + $0xc60] sm:$0xff]
    %v618 = vld [vmem:[%s2 + $0xc68] sm:$0xff]
    %v619 = vld [vmem:[%s2 + $0xc70] sm:$0xff]
    %v620 = vld [vmem:[%s2 + $0xc78] sm:$0xff]
    %v621 = vld [vmem:[%s2 + $0xc80] sm:$0xff]
    %v622 = vld [vmem:[%s2 + $0xc88] sm:$0xff]
    %v623 = vld [vmem:[%s2 + $0xc90] sm:$0xff]
    %v624 = vld [vmem:[%s2 + $0xc98] sm:$0xff]
    %v625 = vld [vmem:[%s2 + $0xca0] sm:$0xff]
    %v626 = vld [vmem:[%s2 + $0xca8] sm:$0xff]
    %v627 = vld [vmem:[%s2 + $0xcb0] sm:$0xff]
    %v628 = vld [vmem:[%s2 + $0xcb8] sm:$0xff]
    %v629 = vld [vmem:[%s2 + $0xcc0] sm:$0xff]
    %v630 = vld [vmem:[%s2 + $0xcc8] sm:$0xff]
    %v631 = vld [vmem:[%s2 + $0xcd0] sm:$0xff]
    %v632 = vld [vmem:[%s2 + $0xcd8] sm:$0xff]
    %v633 = vld [vmem:[%s2 + $0xce0] sm:$0xff]
    %v634 = vld [vmem:[%s2 + $0xce8] sm:$0xff]
    %v635 = vld [vmem:[%s2 + $0xcf0] sm:$0xff]
    %v636 = vld [vmem:[%s2 + $0xcf8] sm:$0xff]
    %v637 = vld [vmem:[%s2 + $0xd00] sm:$0xff]
    %v638 = vld [vmem:[%s2 + $0xd08] sm:$0xff]
    %v639 = vld [vmem:[%s2 + $0xd10] sm:$0xff]
    %v640 = vld [vmem:[%s2 + $0xd18] sm:$0xff]
    %v641 = vld [vmem:[%s2 + $0xd20] sm:$0xff]
    %v642 = vld [vmem:[%s2 + $0xd28] sm:$0xff]
    %v643 = vld [vmem:[%s2 + $0xd30] sm:$0xff]
    %v644 = vld [vmem:[%s2 + $0xd38] sm:$0xff]
    %v645 = vld [vmem:[%s2 + $0xd40] sm:$0xff]
    %v646 = vld [vmem:[%s2 + $0xd48] sm:$0xff]
    %v647 = vld [vmem:[%s2 + $0xd50] sm:$0xff]
    %v648 = vld [vmem:[%s2 + $0xd58] sm:$0xff]
    %v649 = vld [vmem:[%s2 + $0xd60] sm:$0xff]
    %v650 = vld [vmem:[%s2 + $0xd68] sm:$0xff]
    %v651 = vld [vmem:[%s2 + $0xd70] sm:$0xff]
    %v652 = vld [vmem:[%s2 + $0xd78] sm:$0xff]
    %v653 = vld [vmem:[%s2 + $0xd80] sm:$0xff]
    %v654 = vld [vmem:[%s2 + $0xd88] sm:$0xff]
    %v655 = vld [vmem:[%s2 + $0xd90] sm:$0xff]
    %v656 = vld [vmem:[%s2 + $0xd98] sm:$0xff]
    %v657 = vld [vmem:[%s2 + $0xda0] sm:$0xff]
    %v658 = vld [vmem:[%s2 + $0xda8] sm:$0xff]
    %v659 = vld [vmem:[%s2 + $0xdb0] sm:$0xff]
    %v660 = vld [vmem:[%s2 + $0xdb8] sm:$0xff]
    %v661 = vld [vmem:[%s2 + $0xdc0] sm:$0xff]
    %v662 = vld [vmem:[%s2 + $0xdc8] sm:$0xff]
    %v663 = vld [vmem:[%s2 + $0xdd0] sm:$0xff]
    %v664 = vld [vmem:[%s2 + $0xdd8] sm:$0xff]
    %v665 = vld [vmem:[%s2 + $0xde0] sm:$0xff]
    %v666 = vld [vmem:[%s2 + $0xde8] sm:$0xff]
    %v667 = vld [vmem:[%s2 + $0xdf0] sm:$0xff]
    %v668 = vld [vmem:[%s2 + $0xdf8] sm:$0xff]
    %v669 = vld [vmem:[%s2 + $0xe00] sm:$0xff]
    %v670 = vld [vmem:[%s2 + $0xe08] sm:$0xff]
    %vm671 = vcmask 392192
    %v673 = vsel %vm671, %v160, 0
    %v676 = vsel %vm671, %v170, 0
    %v679 = vsel %vm671, %v180, 0
    %v682 = vsel %vm671, %v190, 0
    %v685 = vsel %vm671, %v200, 0
    %v688 = vsel %vm671, %v210, 0
    %v691 = vsel %vm671, %v220, 0
    %693 = vmatprep.subr.mxu0 %v222
    %694 = vmatpush1.msra.mxu0 %v221
    %695 = vmatprep.subr.mxu0 %v225
    %696 = vmatpush1.msra.mxu0 %v224
    %697 = vmatprep.subr.mxu0 %v228
    %698 = vmatpush1.msra.mxu0 %v227
    %699 = vmatprep.subr.mxu0 %v231
    %700 = vmatpush1.msra.mxu0 %v230
    %701 = vmatprep.subr.mxu0 %v234
    %702 = vmatpush1.msra.mxu0 %v233
    %703 = vmatprep.subr.mxu0 %v237
    %704 = vmatpush1.msra.mxu0 %v236
    %705 = vmatprep.subr.mxu0 %v240
    %706 = vmatpush1.msra.mxu0 %v239
    %707 = vmatprep.subr.mxu0 %v243
    %708 = vmatpush1.msra.mxu0 %v242
    %709 = vmatprep.subr.mxu0 %v246
    %710 = vmatpush1.msra.mxu0 %v245
    %711 = vmatprep.subr.mxu0 %v249
    %712 = vmatpush1.msra.mxu0 %v248
    %713 = vmatprep.subr.mxu0 %v252
    %714 = vmatpush1.msra.mxu0 %v251
    %715 = vmatprep.subr.mxu0 %v255
    %716 = vmatpush1.msra.mxu0 %v254
    %717 = vmatprep.subr.mxu0 %v258
    %718 = vmatpush1.msra.mxu0 %v257
    %719 = vmatprep.subr.mxu0 %v261
    %720 = vmatpush1.msra.mxu0 %v260
    %721 = vmatprep.subr.mxu0 %v264
    %722 = vmatpush1.msra.mxu0 %v263
    %723 = vmatprep.subr.mxu0 %v267
    %724 = vmatpush1.msra.mxu0 %v266
    %725 = vmatprep.subr.mxu0 %v270
    %726 = vmatpush1.msra.mxu0 %v269
    %727 = vmatprep.subr.mxu0 %v273
    %728 = vmatpush1.msra.mxu0 %v272
    %729 = vmatprep.subr.mxu0 %v276
    %730 = vmatpush1.msra.mxu0 %v275
    %731 = vmatprep.subr.mxu0 %v279
    %732 = vmatpush1.msra.mxu0 %v278
    %733 = vmatprep.subr.mxu0 %v282
    %734 = vmatpush1.msra.mxu0 %v281
    %735 = vmatprep.subr.mxu0 %v285
    %736 = vmatpush1.msra.mxu0 %v284
    %737 = vmatprep.subr.mxu0 %v288
    %738 = vmatpush1.msra.mxu0 %v287
    %739 = vmatprep.subr.mxu0 %v291
    %740 = vmatpush1.msra.mxu0 %v290
    %741 = vmatprep.subr.mxu0 %v294
    %742 = vmatpush1.msra.mxu0 %v293
    %743 = vmatprep.subr.mxu0 %v297
    %744 = vmatpush1.msra.mxu0 %v296
    %745 = vmatprep.subr.mxu0 %v300
    %746 = vmatpush1.msra.mxu0 %v299
    %747 = vmatprep.subr.mxu0 %v303
    %748 = vmatpush1.msra.mxu0 %v302
    %749 = vmatprep.subr.mxu0 %v306
    %750 = vmatpush1.msra.mxu0 %v305
    %751 = vmatprep.subr.mxu0 %v309
    %752 = vmatpush1.msra.mxu0 %v308
    %753 = vmatprep.subr.mxu0 %v312
    %754 = vmatpush1.msra.mxu0 %v311
    %755 = vmatprep.subr.mxu0 %v315
    %756 = vmatpush1.msra.mxu0 %v314
    %757 = vmatprep.mubr.f32.mxu0 %v152
    %758 = vmatmul.mubr.f32.gmra.mrb[0].mxu0 %v151
    %v759 = vpop.f32.mrb[0].mxu0
    %v760 = vadd.f32 0.0, %v759
    %v761 = vpop.f32.mrb[0].mxu0
    %v762 = vadd.f32 0.0, %v761
    %763 = vmatprep.mubr.f32.mxu0 %v162
    %764 = vmatmul.mubr.f32.gmra.mrb[0].mxu0 %v161
    %v765 = vpop.f32.mrb[0].mxu0
    %v766 = vadd.f32 0.0, %v765
    %v767 = vpop.f32.mrb[0].mxu0
    %v768 = vadd.f32 0.0, %v767
    %769 = vmatprep.mubr.f32.mxu0 %v172
    %770 = vmatmul.mubr.f32.gmra.mrb[0].mxu0 %v171
    %v771 = vpop.f32.mrb[0].mxu0
    %v772 = vadd.f32 0.0, %v771
    %v773 = vpop.f32.mrb[0].mxu0
    %v774 = vadd.f32 0.0, %v773
    %775 = vmatprep.mubr.f32.mxu0 %v182
    %776 = vmatmul.mubr.f32.gmra.mrb[0].mxu0 %v181
    %v777 = vpop.f32.mrb[0].mxu0
    %v778 = vadd.f32 0.0, %v777
    %v779 = vpop.f32.mrb[0].mxu0
    %v780 = vadd.f32 0.0, %v779
    %781 = vmatprep.mubr.f32.mxu0 %v192
    %782 = vmatmul.mubr.f32.gmra.mrb[0].mxu0 %v191
    %v783 = vpop.f32.mrb[0].mxu0
    %v784 = vadd.f32 0.0, %v783
    %v785 = vpop.f32.mrb[0].mxu0
    %v786 = vadd.f32 0.0, %v785
    %787 = vmatprep.mubr.f32.mxu0 %v202
    %788 = vmatmul.mubr.f32.gmra.mrb[0].mxu0 %v201
    %v789 = vpop.f32.mrb[0].mxu0
    %v790 = vadd.f32 0.0, %v789
    %v791 = vpop.f32.mrb[0].mxu0
    %v792 = vadd.f32 0.0, %v791
    %793 = vmatprep.mubr.f32.mxu0 %v212
    %794 = vmatmul.mubr.f32.gmra.mrb[0].mxu0 %v211
    %v795 = vpop.f32.mrb[0].mxu0
    %v796 = vadd.f32 0.0, %v795
    %v797 = vpop.f32.mrb[0].mxu0
    %v798 = vadd.f32 0.0, %v797
    %799 = vdwg.mxu0
    %800 = vmatprep.subr.mxu0 %v318
    %801 = vmatpush1.msra.mxu0 %v317
    %802 = vmatprep.subr.mxu0 %v321
    %803 = vmatpush1.msra.mxu0 %v320
    %804 = vmatprep.subr.mxu0 %v324
    %805 = vmatpush1.msra.mxu0 %v323
    %806 = vmatprep.subr.mxu0 %v327
    %807 = vmatpush1.msra.mxu0 %v326
    %808 = vmatprep.subr.mxu0 %v330
    %809 = vmatpush1.msra.mxu0 %v329
    %810 = vmatprep.subr.mxu0 %v333
    %811 = vmatpush1.msra.mxu0 %v332
    %812 = vmatprep.subr.mxu0 %v336
    %813 = vmatpush1.msra.mxu0 %v335
    %814 = vmatprep.subr.mxu0 %v339
    %815 = vmatpush1.msra.mxu0 %v338
    %816 = vmatprep.subr.mxu0 %v342
    %817 = vmatpush1.msra.mxu0 %v341
    %818 = vmatprep.subr.mxu0 %v345
    %819 = vmatpush1.msra.mxu0 %v344
    %820 = vmatprep.subr.mxu0 %v348
    %821 = vmatpush1.msra.mxu0 %v347
    %822 = vmatprep.subr.mxu0 %v351
    %823 = vmatpush1.msra.mxu0 %v350
    %824 = vmatprep.subr.mxu0 %v354
    %825 = vmatpush1.msra.mxu0 %v353
    %826 = vmatprep.subr.mxu0 %v357
    %827 = vmatpush1.msra.mxu0 %v356
    %828 = vmatprep.subr.mxu0 %v360
    %829 = vmatpush1.msra.mxu0 %v359
    %830 = vmatprep.subr.mxu0 %v363
    %831 = vmatpush1.msra.mxu0 %v362
    %832 = vmatprep.subr.mxu0 %v366
    %833 = vmatpush1.msra.mxu0 %v365
    %834 = vmatprep.subr.mxu0 %v369
    %835 = vmatpush1.msra.mxu0 %v368
    %836 = vmatprep.subr.mxu0 %v372
    %837 = vmatpush1.msra.mxu0 %v371
    %838 = vmatprep.subr.mxu0 %v375
    %839 = vmatpush1.msra.mxu0 %v374
    %840 = vmatprep.subr.mxu0 %v378
    %841 = vmatpush1.msra.mxu0 %v377
    %842 = vmatprep.subr.mxu0 %v381
    %843 = vmatpush1.msra.mxu0 %v380
    %844 = vmatprep.subr.mxu0 %v384
    %845 = vmatpush1.msra.mxu0 %v383
    %846 = vmatprep.subr.mxu0 %v387
    %847 = vmatpush1.msra.mxu0 %v386
    %848 = vmatprep.subr.mxu0 %v390
    %849 = vmatpush1.msra.mxu0 %v389
    %850 = vmatprep.subr.mxu0 %v393
    %851 = vmatpush1.msra.mxu0 %v392
    %852 = vmatprep.subr.mxu0 %v396
    %853 = vmatpush1.msra.mxu0 %v395
    %854 = vmatprep.subr.mxu0 %v399
    %855 = vmatpush1.msra.mxu0 %v398
    %856 = vmatprep.subr.mxu0 %v402
    %857 = vmatpush1.msra.mxu0 %v401
    %858 = vmatprep.subr.mxu0 %v405
    %859 = vmatpush1.msra.mxu0 %v404
    %860 = vmatprep.subr.mxu0 %v408
    %861 = vmatpush1.msra.mxu0 %v407
    %862 = vmatprep.subr.mxu0 %v411
    %863 = vmatpush1.msra.mxu0 %v410
    %864 = vmatprep.mubr.f32.mxu0 %v154
    %865 = vmatmul.mubr.f32.gmra.mrb[0].mxu0 %v153
    %v866 = vpop.f32.mrb[0].mxu0
    %v867 = vadd.f32 %v760, %v866
    %v868 = vpop.f32.mrb[0].mxu0
    %v869 = vadd.f32 %v762, %v868
    %870 = vmatprep.mubr.f32.mxu0 %v164
    %871 = vmatmul.mubr.f32.gmra.mrb[0].mxu0 %v163
    %v872 = vpop.f32.mrb[0].mxu0
    %v873 = vadd.f32 %v766, %v872
    %v874 = vpop.f32.mrb[0].mxu0
    %v875 = vadd.f32 %v768, %v874
    %876 = vmatprep.mubr.f32.mxu0 %v174
    %877 = vmatmul.mubr.f32.gmra.mrb[0].mxu0 %v173
    %v878 = vpop.f32.mrb[0].mxu0
    %v879 = vadd.f32 %v772, %v878
    %v880 = vpop.f32.mrb[0].mxu0
    %v881 = vadd.f32 %v774, %v880
    %882 = vmatprep.mubr.f32.mxu0 %v184
    %883 = vmatmul.mubr.f32.gmra.mrb[0].mxu0 %v183
    %v884 = vpop.f32.mrb[0].mxu0
    %v885 = vadd.f32 %v778, %v884
    %v886 = vpop.f32.mrb[0].mxu0
    %v887 = vadd.f32 %v780, %v886
    %888 = vmatprep.mubr.f32.mxu0 %v194
    %889 = vmatmul.mubr.f32.gmra.mrb[0].mxu0 %v193
    %v890 = vpop.f32.mrb[0].mxu0
    %v891 = vadd.f32 %v784, %v890
    %v892 = vpop.f32.mrb[0].mxu0
    %v893 = vadd.f32 %v786, %v892
    %894 = vmatprep.mubr.f32.mxu0 %v204
    %895 = vmatmul.mubr.f32.gmra.mrb[0].mxu0 %v203
    %v896 = vpop.f32.mrb[0].mxu0
    %v897 = vadd.f32 %v790, %v896
    %v898 = vpop.f32.mrb[0].mxu0
    %v899 = vadd.f32 %v792, %v898
    %900 = vmatprep.mubr.f32.mxu0 %v214
    %901 = vmatmul.mubr.f32.gmra.mrb[0].mxu0 %v213
    %v902 = vpop.f32.mrb[0].mxu0
    %v903 = vadd.f32 %v796, %v902
    %v904 = vpop.f32.mrb[0].mxu0
    %v905 = vadd.f32 %v798, %v904
    %906 = vdwg.mxu0
    %907 = vmatprep.subr.mxu0 %v414
    %908 = vmatpush1.msra.mxu0 %v413
    %909 = vmatprep.subr.mxu0 %v417
    %910 = vmatpush1.msra.mxu0 %v416
    %911 = vmatprep.subr.mxu0 %v420
    %912 = vmatpush1.msra.mxu0 %v419
    %913 = vmatprep.subr.mxu0 %v423
    %914 = vmatpush1.msra.mxu0 %v422
    %915 = vmatprep.subr.mxu0 %v426
    %916 = vmatpush1.msra.mxu0 %v425
    %917 = vmatprep.subr.mxu0 %v429
    %918 = vmatpush1.msra.mxu0 %v428
    %919 = vmatprep.subr.mxu0 %v432
    %920 = vmatpush1.msra.mxu0 %v431
    %921 = vmatprep.subr.mxu0 %v435
    %922 = vmatpush1.msra.mxu0 %v434
    %923 = vmatprep.subr.mxu0 %v438
    %924 = vmatpush1.msra.mxu0 %v437
    %925 = vmatprep.subr.mxu0 %v441
    %926 = vmatpush1.msra.mxu0 %v440
    %927 = vmatprep.subr.mxu0 %v444
    %928 = vmatpush1.msra.mxu0 %v443
    %929 = vmatprep.subr.mxu0 %v447
    %930 = vmatpush1.msra.mxu0 %v446
    %931 = vmatprep.subr.mxu0 %v450
    %932 = vmatpush1.msra.mxu0 %v449
    %933 = vmatprep.subr.mxu0 %v453
    %934 = vmatpush1.msra.mxu0 %v452
    %935 = vmatprep.subr.mxu0 %v456
    %936 = vmatpush1.msra.mxu0 %v455
    %937 = vmatprep.subr.mxu0 %v459
    %938 = vmatpush1.msra.mxu0 %v458
    %939 = vmatprep.subr.mxu0 %v462
    %940 = vmatpush1.msra.mxu0 %v461
    %941 = vmatprep.subr.mxu0 %v465
    %942 = vmatpush1.msra.mxu0 %v464
    %943 = vmatprep.subr.mxu0 %v468
    %944 = vmatpush1.msra.mxu0 %v467
    %945 = vmatprep.subr.mxu0 %v471
    %946 = vmatpush1.msra.mxu0 %v470
    %947 = vmatprep.subr.mxu0 %v474
    %948 = vmatpush1.msra.mxu0 %v473
    %949 = vmatprep.subr.mxu0 %v477
    %950 = vmatpush1.msra.mxu0 %v476
    %951 = vmatprep.subr.mxu0 %v480
    %952 = vmatpush1.msra.mxu0 %v479
    %953 = vmatprep.subr.mxu0 %v483
    %954 = vmatpush1.msra.mxu0 %v482
    %955 = vmatprep.subr.mxu0 %v486
    %956 = vmatpush1.msra.mxu0 %v485
    %957 = vmatprep.subr.mxu0 %v489
    %958 = vmatpush1.msra.mxu0 %v488
    %959 = vmatprep.subr.mxu0 %v492
    %960 = vmatpush1.msra.mxu0 %v491
    %961 = vmatprep.subr.mxu0 %v495
    %962 = vmatpush1.msra.mxu0 %v494
    %963 = vmatprep.subr.mxu0 %v498
    %964 = vmatpush1.msra.mxu0 %v497
    %965 = vmatprep.subr.mxu0 %v501
    %966 = vmatpush1.msra.mxu0 %v500
    %967 = vmatprep.subr.mxu0 %v504
    %968 = vmatpush1.msra.mxu0 %v503
    %969 = vmatprep.subr.mxu0 %v507
    %970 = vmatpush1.msra.mxu0 %v506
    %971 = vmatprep.mubr.f32.mxu0 %v156
    %972 = vmatmul.mubr.f32.gmra.mrb[0].mxu0 %v155
    %v973 = vpop.f32.mrb[0].mxu0
    %v974 = vadd.f32 %v867, %v973
    %v975 = vpop.f32.mrb[0].mxu0
    %v976 = vadd.f32 %v869, %v975
    %977 = vmatprep.mubr.f32.mxu0 %v166
    %978 = vmatmul.mubr.f32.gmra.mrb[0].mxu0 %v165
    %v979 = vpop.f32.mrb[0].mxu0
    %v980 = vadd.f32 %v873, %v979
    %v981 = vpop.f32.mrb[0].mxu0
    %v982 = vadd.f32 %v875, %v981
    %983 = vmatprep.mubr.f32.mxu0 %v176
    %984 = vmatmul.mubr.f32.gmra.mrb[0].mxu0 %v175
    %v985 = vpop.f32.mrb[0].mxu0
    %v986 = vadd.f32 %v879, %v985
    %v987 = vpop.f32.mrb[0].mxu0
    %v988 = vadd.f32 %v881, %v987
    %989 = vmatprep.mubr.f32.mxu0 %v186
    %990 = vmatmul.mubr.f32.gmra.mrb[0].mxu0 %v185
    %v991 = vpop.f32.mrb[0].mxu0
    %v992 = vadd.f32 %v885, %v991
    %v993 = vpop.f32.mrb[0].mxu0
    %v994 = vadd.f32 %v887, %v993
    %995 = vmatprep.mubr.f32.mxu0 %v196
    %996 = vmatmul.mubr.f32.gmra.mrb[0].mxu0 %v195
    %v997 = vpop.f32.mrb[0].mxu0
    %v998 = vadd.f32 %v891, %v997
    %v999 = vpop.f32.mrb[0].mxu0
    %v1000 = vadd.f32 %v893, %v999
    %1001 = vmatprep.mubr.f32.mxu0 %v206
    %1002 = vmatmul.mubr.f32.gmra.mrb[0].mxu0 %v205
    %v1003 = vpop.f32.mrb[0].mxu0
    %v1004 = vadd.f32 %v897, %v1003
    %v1005 = vpop.f32.mrb[0].mxu0
    %v1006 = vadd.f32 %v899, %v1005
    %1007 = vmatprep.mubr.f32.mxu0 %v216
    %1008 = vmatmul.mubr.f32.gmra.mrb[0].mxu0 %v215
    %v1009 = vpop.f32.mrb[0].mxu0
    %v1010 = vadd.f32 %v903, %v1009
    %v1011 = vpop.f32.mrb[0].mxu0
    %v1012 = vadd.f32 %v905, %v1011
    %1013 = vdwg.mxu0
    %1014 = vmatprep.subr.mxu0 %v510
    %1015 = vmatpush1.msra.mxu0 %v509
    %1016 = vmatprep.subr.mxu0 %v513
    %1017 = vmatpush1.msra.mxu0 %v512
    %1018 = vmatprep.subr.mxu0 %v516
    %1019 = vmatpush1.msra.mxu0 %v515
    %1020 = vmatprep.subr.mxu0 %v519
    %1021 = vmatpush1.msra.mxu0 %v518
    %1022 = vmatprep.subr.mxu0 %v522
    %1023 = vmatpush1.msra.mxu0 %v521
    %1024 = vmatprep.subr.mxu0 %v525
    %1025 = vmatpush1.msra.mxu0 %v524
    %1026 = vmatprep.subr.mxu0 %v528
    %1027 = vmatpush1.msra.mxu0 %v527
    %1028 = vmatprep.subr.mxu0 %v531
    %1029 = vmatpush1.msra.mxu0 %v530
    %1030 = vmatprep.subr.mxu0 %v534
    %1031 = vmatpush1.msra.mxu0 %v533
    %1032 = vmatprep.subr.mxu0 %v537
    %1033 = vmatpush1.msra.mxu0 %v536
    %1034 = vmatprep.subr.mxu0 %v540
    %1035 = vmatpush1.msra.mxu0 %v539
    %1036 = vmatprep.subr.mxu0 %v543
    %1037 = vmatpush1.msra.mxu0 %v542
    %1038 = vmatprep.subr.mxu0 %v546
    %1039 = vmatpush1.msra.mxu0 %v545
    %1040 = vmatprep.subr.mxu0 %v549
    %1041 = vmatpush1.msra.mxu0 %v548
    %1042 = vmatprep.subr.mxu0 %v552
    %1043 = vmatpush1.msra.mxu0 %v551
    %1044 = vmatprep.subr.mxu0 %v555
    %1045 = vmatpush1.msra.mxu0 %v554
    %1046 = vmatprep.subr.mxu0 %v558
    %1047 = vmatpush1.msra.mxu0 %v557
    %1048 = vmatprep.subr.mxu0 %v561
    %1049 = vmatpush1.msra.mxu0 %v560
    %1050 = vmatprep.subr.mxu0 %v564
    %1051 = vmatpush1.msra.mxu0 %v563
    %1052 = vmatprep.subr.mxu0 %v567
    %1053 = vmatpush1.msra.mxu0 %v566
    %1054 = vmatprep.subr.mxu0 %v570
    %1055 = vmatpush1.msra.mxu0 %v569
    %1056 = vmatprep.subr.mxu0 %v573
    %1057 = vmatpush1.msra.mxu0 %v572
    %1058 = vmatprep.subr.mxu0 %v576
    %1059 = vmatpush1.msra.mxu0 %v575
    %1060 = vmatprep.subr.mxu0 %v579
    %1061 = vmatpush1.msra.mxu0 %v578
    %1062 = vmatprep.subr.mxu0 %v582
    %1063 = vmatpush1.msra.mxu0 %v581
    %1064 = vmatprep.subr.mxu0 %v585
    %1065 = vmatpush1.msra.mxu0 %v584
    %1066 = vmatprep.subr.mxu0 %v588
    %1067 = vmatpush1.msra.mxu0 %v587
    %1068 = vmatprep.subr.mxu0 %v591
    %1069 = vmatpush1.msra.mxu0 %v590
    %1070 = vmatprep.subr.mxu0 %v594
    %1071 = vmatpush1.msra.mxu0 %v593
    %1072 = vmatprep.subr.mxu0 %v597
    %1073 = vmatpush1.msra.mxu0 %v596
    %1074 = vmatprep.subr.mxu0 %v600
    %1075 = vmatpush1.msra.mxu0 %v599
    %1076 = vmatprep.subr.mxu0 %v603
    %1077 = vmatpush1.msra.mxu0 %v602
    %1078 = vmatprep.mubr.f32.mxu0 %v158
    %1079 = vmatmul.mubr.f32.gmra.mrb[0].mxu0 %v157
    %v1080 = vpop.f32.mrb[0].mxu0
    %v1081 = vadd.f32 %v974, %v1080
    %v1082 = vpop.f32.mrb[0].mxu0
    %v1083 = vadd.f32 %v976, %v1082
    %1084 = vmatprep.mubr.f32.mxu0 %v168
    %1085 = vmatmul.mubr.f32.gmra.mrb[0].mxu0 %v167
    %v1086 = vpop.f32.mrb[0].mxu0
    %v1087 = vadd.f32 %v980, %v1086
    %v1088 = vpop.f32.mrb[0].mxu0
    %v1089 = vadd.f32 %v982, %v1088
    %1090 = vmatprep.mubr.f32.mxu0 %v178
    %1091 = vmatmul.mubr.f32.gmra.mrb[0].mxu0 %v177
    %v1092 = vpop.f32.mrb[0].mxu0
    %v1093 = vadd.f32 %v986, %v1092
    %v1094 = vpop.f32.mrb[0].mxu0
    %v1095 = vadd.f32 %v988, %v1094
    %1096 = vmatprep.mubr.f32.mxu0 %v188
    %1097 = vmatmul.mubr.f32.gmra.mrb[0].mxu0 %v187
    %v1098 = vpop.f32.mrb[0].mxu0
    %v1099 = vadd.f32 %v992, %v1098
    %v1100 = vpop.f32.mrb[0].mxu0
    %v1101 = vadd.f32 %v994, %v1100
    %1102 = vmatprep.mubr.f32.mxu0 %v198
    %1103 = vmatmul.mubr.f32.gmra.mrb[0].mxu0 %v197
    %v1104 = vpop.f32.mrb[0].mxu0
    %v1105 = vadd.f32 %v998, %v1104
    %v1106 = vpop.f32.mrb[0].mxu0
    %v1107 = vadd.f32 %v1000, %v1106
    %1108 = vmatprep.mubr.f32.mxu0 %v208
    %1109 = vmatmul.mubr.f32.gmra.mrb[0].mxu0 %v207
    %v1110 = vpop.f32.mrb[0].mxu0
    %v1111 = vadd.f32 %v1004, %v1110
    %v1112 = vpop.f32.mrb[0].mxu0
    %v1113 = vadd.f32 %v1006, %v1112
    %1114 = vmatprep.mubr.f32.mxu0 %v218
    %1115 = vmatmul.mubr.f32.gmra.mrb[0].mxu0 %v217
    %v1116 = vpop.f32.mrb[0].mxu0
    %v1117 = vadd.f32 %v1010, %v1116
    %v1118 = vpop.f32.mrb[0].mxu0
    %v1119 = vadd.f32 %v1012, %v1118
    %1120 = vdwg.mxu0
    %1121 = vmatprep.subr.mxu0 %v606
    %1122 = vmatpush1.msra.mxu0 %v605
    %1123 = vmatprep.subr.mxu0 %v609
    %1124 = vmatpush1.msra.mxu0 %v608
    %1125 = vmatprep.subr.mxu0 %v612
    %1126 = vmatpush1.msra.mxu0 %v611
    %1127 = vmatprep.subr.mxu0 %v615
    %1128 = vmatpush1.msra.mxu0 %v614
    %1129 = vmatprep.subr.mxu0 %v618
    %1130 = vmatpush1.msra.mxu0 %v617
    %1131 = vmatprep.subr.mxu0 %v621
    %1132 = vmatpush1.msra.mxu0 %v620
    %1133 = vmatprep.subr.mxu0 %v624
    %1134 = vmatpush1.msra.mxu0 %v623
    %1135 = vmatprep.subr.mxu0 %v627
    %1136 = vmatpush1.msra.mxu0 %v626
    %1137 = vmatprep.subr.mxu0 %v630
    %1138 = vmatpush1.msra.mxu0 %v629
    %1139 = vmatprep.subr.mxu0 %v633
    %1140 = vmatpush1.msra.mxu0 %v632
    %1141 = vmatprep.subr.mxu0 %v636
    %1142 = vmatpush1.msra.mxu0 %v635
    %1143 = vmatprep.subr.mxu0 %v639
    %1144 = vmatpush1.msra.mxu0 %v638
    %1145 = vmatprep.subr.mxu0 %v642
    %1146 = vmatpush1.msra.mxu0 %v641
    %1147 = vmatprep.subr.mxu0 %v645
    %1148 = vmatpush1.msra.mxu0 %v644
    %1149 = vmatprep.subr.mxu0 %v648
    %1150 = vmatpush1.msra.mxu0 %v647
    %1151 = vmatprep.subr.mxu0 %v651
    %1152 = vmatpush1.msra.mxu0 %v650
    %1153 = vmatprep.subr.mxu0 %v654
    %1154 = vmatpush1.msra.mxu0 %v653
    %1155 = vmatprep.subr.mxu0 %v657
    %1156 = vmatpush1.msra.mxu0 %v656
    %1157 = vmatprep.subr.mxu0 %v660
    %1158 = vmatpush1.msra.mxu0 %v659
    %1159 = vmatprep.subr.mxu0 %v663
    %1160 = vmatpush1.msra.mxu0 %v662
    %1161 = vmatprep.subr.mxu0 %v666
    %1162 = vmatpush1.msra.mxu0 %v665
    %1163 = vmatprep.subr.mxu0 %v669
    %1164 = vmatpush1.msra.mxu0 %v668
    %1165 = vmatprep.subr.mxu0 0.0
    %1166 = vmatpush1.msra.mxu0 0.0
    %1167 = vmatprep.subr.mxu0 0.0
    %1168 = vmatpush1.msra.mxu0 0.0
    %1169 = vmatprep.subr.mxu0 0.0
    %1170 = vmatpush1.msra.mxu0 0.0
    %1171 = vmatprep.subr.mxu0 0.0
    %1172 = vmatpush1.msra.mxu0 0.0
    %1173 = vmatprep.subr.mxu0 0.0
    %1174 = vmatpush1.msra.mxu0 0.0
    %1175 = vmatprep.subr.mxu0 0.0
    %1176 = vmatpush1.msra.mxu0 0.0
    %1177 = vmatprep.subr.mxu0 0.0
    %1178 = vmatpush1.msra.mxu0 0.0
    %1179 = vmatprep.subr.mxu0 0.0
    %1180 = vmatpush1.msra.mxu0 0.0
    %1181 = vmatprep.subr.mxu0 0.0
    %1182 = vmatpush1.msra.mxu0 0.0
    %1183 = vmatprep.subr.mxu0 0.0
    %1184 = vmatpush1.msra.mxu0 0.0
    %1185 = vmatprep.mubr.f32.mxu0 %v673
    %1186 = vmatmul.mubr.f32.gmra.mrb[0].mxu0 %v159
    %v1187 = vpop.f32.mrb[0].mxu0
    %v1188 = vadd.f32 %v1081, %v1187
    %v1189 = vpop.f32.mrb[0].mxu0
    %v1190 = vadd.f32 %v1083, %v1189
    %1191 = vmatprep.mubr.f32.mxu0 %v676
    %1192 = vmatmul.mubr.f32.gmra.mrb[0].mxu0 %v169
    %v1193 = vpop.f32.mrb[0].mxu0
    %v1194 = vadd.f32 %v1087, %v1193
    %v1195 = vpop.f32.mrb[0].mxu0
    %v1196 = vadd.f32 %v1089, %v1195
    %1197 = vmatprep.mubr.f32.mxu0 %v679
    %1198 = vmatmul.mubr.f32.gmra.mrb[0].mxu0 %v179
    %v1199 = vpop.f32.mrb[0].mxu0
    %v1200 = vadd.f32 %v1093, %v1199
    %v1201 = vpop.f32.mrb[0].mxu0
    %v1202 = vadd.f32 %v1095, %v1201
    %1203 = vmatprep.mubr.f32.mxu0 %v682
    %1204 = vmatmul.mubr.f32.gmra.mrb[0].mxu0 %v189
    %v1205 = vpop.f32.mrb[0].mxu0
    %v1206 = vadd.f32 %v1099, %v1205
    %v1207 = vpop.f32.mrb[0].mxu0
    %v1208 = vadd.f32 %v1101, %v1207
    %1209 = vmatprep.mubr.f32.mxu0 %v685
    %1210 = vmatmul.mubr.f32.gmra.mrb[0].mxu0 %v199
    %v1211 = vpop.f32.mrb[0].mxu0
    %v1212 = vadd.f32 %v1105, %v1211
    %v1213 = vpop.f32.mrb[0].mxu0
    %v1214 = vadd.f32 %v1107, %v1213
    %1215 = vmatprep.mubr.f32.mxu0 %v688
    %1216 = vmatmul.mubr.f32.gmra.mrb[0].mxu0 %v209
    %v1217 = vpop.f32.mrb[0].mxu0
    %v1218 = vadd.f32 %v1111, %v1217
    %v1219 = vpop.f32.mrb[0].mxu0
    %v1220 = vadd.f32 %v1113, %v1219
    %1221 = vmatprep.mubr.f32.mxu0 %v691
    %1222 = vmatmul.mubr.f32.gmra.mrb[0].mxu0 %v219
    %v1223 = vpop.f32.mrb[0].mxu0
    %v1224 = vadd.f32 %v1117, %v1223
    %v1225 = vpop.f32.mrb[0].mxu0
    %v1226 = vadd.f32 %v1119, %v1225
    %1227 = vdwg.mxu0
    %1228 = vmatprep.subr.mxu0 0.0
    %1229 = vmatpush1.msra.mxu0 %v223
    %1230 = vmatprep.subr.mxu0 0.0
    %1231 = vmatpush1.msra.mxu0 %v226
    %1232 = vmatprep.subr.mxu0 0.0
    %1233 = vmatpush1.msra.mxu0 %v229
    %1234 = vmatprep.subr.mxu0 0.0
    %1235 = vmatpush1.msra.mxu0 %v232
    %1236 = vmatprep.subr.mxu0 0.0
    %1237 = vmatpush1.msra.mxu0 %v235
    %1238 = vmatprep.subr.mxu0 0.0
    %1239 = vmatpush1.msra.mxu0 %v238
    %1240 = vmatprep.subr.mxu0 0.0
    %1241 = vmatpush1.msra.mxu0 %v241
    %1242 = vmatprep.subr.mxu0 0.0
    %1243 = vmatpush1.msra.mxu0 %v244
    %1244 = vmatprep.subr.mxu0 0.0
    %1245 = vmatpush1.msra.mxu0 %v247
    %1246 = vmatprep.subr.mxu0 0.0
    %1247 = vmatpush1.msra.mxu0 %v250
    %1248 = vmatprep.subr.mxu0 0.0
    %1249 = vmatpush1.msra.mxu0 %v253
    %1250 = vmatprep.subr.mxu0 0.0
    %1251 = vmatpush1.msra.mxu0 %v256
    %1252 = vmatprep.subr.mxu0 0.0
    %1253 = vmatpush1.msra.mxu0 %v259
    %1254 = vmatprep.subr.mxu0 0.0
    %1255 = vmatpush1.msra.mxu0 %v262
    %1256 = vmatprep.subr.mxu0 0.0
    %1257 = vmatpush1.msra.mxu0 %v265
    %1258 = vmatprep.subr.mxu0 0.0
    %1259 = vmatpush1.msra.mxu0 %v268
    %1260 = vmatprep.subr.mxu0 0.0
    %1261 = vmatpush1.msra.mxu0 %v271
    %1262 = vmatprep.subr.mxu0 0.0
    %1263 = vmatpush1.msra.mxu0 %v274
    %1264 = vmatprep.subr.mxu0 0.0
    %1265 = vmatpush1.msra.mxu0 %v277
    %1266 = vmatprep.subr.mxu0 0.0
    %1267 = vmatpush1.msra.mxu0 %v280
    %1268 = vmatprep.subr.mxu0 0.0
    %1269 = vmatpush1.msra.mxu0 %v283
    %1270 = vmatprep.subr.mxu0 0.0
    %1271 = vmatpush1.msra.mxu0 %v286
    %1272 = vmatprep.subr.mxu0 0.0
    %1273 = vmatpush1.msra.mxu0 %v289
    %1274 = vmatprep.subr.mxu0 0.0
    %1275 = vmatpush1.msra.mxu0 %v292
    %1276 = vmatprep.subr.mxu0 0.0
    %1277 = vmatpush1.msra.mxu0 %v295
    %1278 = vmatprep.subr.mxu0 0.0
    %1279 = vmatpush1.msra.mxu0 %v298
    %1280 = vmatprep.subr.mxu0 0.0
    %1281 = vmatpush1.msra.mxu0 %v301
    %1282 = vmatprep.subr.mxu0 0.0
    %1283 = vmatpush1.msra.mxu0 %v304
    %1284 = vmatprep.subr.mxu0 0.0
    %1285 = vmatpush1.msra.mxu0 %v307
    %1286 = vmatprep.subr.mxu0 0.0
    %1287 = vmatpush1.msra.mxu0 %v310
    %1288 = vmatprep.subr.mxu0 0.0
    %1289 = vmatpush1.msra.mxu0 %v313
    %1290 = vmatprep.subr.mxu0 0.0
    %1291 = vmatpush1.msra.mxu0 %v316
    %1292 = vmatprep.mubr.f32.mxu0 %v152
    %1293 = vmatmul.mubr.f32.gmra.mrb[0].mxu0 %v151
    %v1294 = vpop.f32.mrb[0].mxu0
    %v1295 = vadd.f32 0.0, %v1294
    %v1296 = vpop.f32.mrb[0].mxu0
    %1297 = vmatprep.mubr.f32.mxu0 %v162
    %1298 = vmatmul.mubr.f32.gmra.mrb[0].mxu0 %v161
    %v1299 = vpop.f32.mrb[0].mxu0
    %v1300 = vadd.f32 0.0, %v1299
    %v1301 = vpop.f32.mrb[0].mxu0
    %1302 = vmatprep.mubr.f32.mxu0 %v172
    %1303 = vmatmul.mubr.f32.gmra.mrb[0].mxu0 %v171
    %v1304 = vpop.f32.mrb[0].mxu0
    %v1305 = vadd.f32 0.0, %v1304
    %v1306 = vpop.f32.mrb[0].mxu0
    %1307 = vmatprep.mubr.f32.mxu0 %v182
    %1308 = vmatmul.mubr.f32.gmra.mrb[0].mxu0 %v181
    %v1309 = vpop.f32.mrb[0].mxu0
    %v1310 = vadd.f32 0.0, %v1309
    %v1311 = vpop.f32.mrb[0].mxu0
    %1312 = vmatprep.mubr.f32.mxu0 %v192
    %1313 = vmatmul.mubr.f32.gmra.mrb[0].mxu0 %v191
    %v1314 = vpop.f32.mrb[0].mxu0
    %v1315 = vadd.f32 0.0, %v1314
    %v1316 = vpop.f32.mrb[0].mxu0
    %1317 = vmatprep.mubr.f32.mxu0 %v202
    %1318 = vmatmul.mubr.f32.gmra.mrb[0].mxu0 %v201
    %v1319 = vpop.f32.mrb[0].mxu0
    %v1320 = vadd.f32 0.0, %v1319
    %v1321 = vpop.f32.mrb[0].mxu0
    %1322 = vmatprep.mubr.f32.mxu0 %v212
    %1323 = vmatmul.mubr.f32.gmra.mrb[0].mxu0 %v211
    %v1324 = vpop.f32.mrb[0].mxu0
    %v1325 = vadd.f32 0.0, %v1324
    %v1326 = vpop.f32.mrb[0].mxu0
    %1327 = vdwg.mxu0
    %1328 = vmatprep.subr.mxu0 0.0
    %1329 = vmatpush1.msra.mxu0 %v319
    %1330 = vmatprep.subr.mxu0 0.0
    %1331 = vmatpush1.msra.mxu0 %v322
    %1332 = vmatprep.subr.mxu0 0.0
    %1333 = vmatpush1.msra.mxu0 %v325
    %1334 = vmatprep.subr.mxu0 0.0
    %1335 = vmatpush1.msra.mxu0 %v328
    %1336 = vmatprep.subr.mxu0 0.0
    %1337 = vmatpush1.msra.mxu0 %v331
    %1338 = vmatprep.subr.mxu0 0.0
    %1339 = vmatpush1.msra.mxu0 %v334
    %1340 = vmatprep.subr.mxu0 0.0
    %1341 = vmatpush1.msra.mxu0 %v337
    %1342 = vmatprep.subr.mxu0 0.0
    %1343 = vmatpush1.msra.mxu0 %v340
    %1344 = vmatprep.subr.mxu0 0.0
    %1345 = vmatpush1.msra.mxu0 %v343
    %1346 = vmatprep.subr.mxu0 0.0
    %1347 = vmatpush1.msra.mxu0 %v346
    %1348 = vmatprep.subr.mxu0 0.0
    %1349 = vmatpush1.msra.mxu0 %v349
    %1350 = vmatprep.subr.mxu0 0.0
    %1351 = vmatpush1.msra.mxu0 %v352
    %1352 = vmatprep.subr.mxu0 0.0
    %1353 = vmatpush1.msra.mxu0 %v355
    %1354 = vmatprep.subr.mxu0 0.0
    %1355 = vmatpush1.msra.mxu0 %v358
    %1356 = vmatprep.subr.mxu0 0.0
    %1357 = vmatpush1.msra.mxu0 %v361
    %1358 = vmatprep.subr.mxu0 0.0
    %1359 = vmatpush1.msra.mxu0 %v364
    %1360 = vmatprep.subr.mxu0 0.0
    %1361 = vmatpush1.msra.mxu0 %v367
    %1362 = vmatprep.subr.mxu0 0.0
    %1363 = vmatpush1.msra.mxu0 %v370
    %1364 = vmatprep.subr.mxu0 0.0
    %1365 = vmatpush1.msra.mxu0 %v373
    %1366 = vmatprep.subr.mxu0 0.0
    %1367 = vmatpush1.msra.mxu0 %v376
    %1368 = vmatprep.subr.mxu0 0.0
    %1369 = vmatpush1.msra.mxu0 %v379
    %1370 = vmatprep.subr.mxu0 0.0
    %1371 = vmatpush1.msra.mxu0 %v382
    %1372 = vmatprep.subr.mxu0 0.0
    %1373 = vmatpush1.msra.mxu0 %v385
    %1374 = vmatprep.subr.mxu0 0.0
    %1375 = vmatpush1.msra.mxu0 %v388
    %1376 = vmatprep.subr.mxu0 0.0
    %1377 = vmatpush1.msra.mxu0 %v391
    %1378 = vmatprep.subr.mxu0 0.0
    %1379 = vmatpush1.msra.mxu0 %v394
    %1380 = vmatprep.subr.mxu0 0.0
    %1381 = vmatpush1.msra.mxu0 %v397
    %1382 = vmatprep.subr.mxu0 0.0
    %1383 = vmatpush1.msra.mxu0 %v400
    %1384 = vmatprep.subr.mxu0 0.0
    %1385 = vmatpush1.msra.mxu0 %v403
    %1386 = vmatprep.subr.mxu0 0.0
    %1387 = vmatpush1.msra.mxu0 %v406
    %1388 = vmatprep.subr.mxu0 0.0
    %1389 = vmatpush1.msra.mxu0 %v409
    %1390 = vmatprep.subr.mxu0 0.0
    %1391 = vmatpush1.msra.mxu0 %v412
    %1392 = vmatprep.mubr.f32.mxu0 %v154
    %1393 = vmatmul.mubr.f32.gmra.mrb[0].mxu0 %v153
    %v1394 = vpop.f32.mrb[0].mxu0
    %v1395 = vadd.f32 %v1295, %v1394
    %v1396 = vpop.f32.mrb[0].mxu0
    %1397 = vmatprep.mubr.f32.mxu0 %v164
    %1398 = vmatmul.mubr.f32.gmra.mrb[0].mxu0 %v163
    %v1399 = vpop.f32.mrb[0].mxu0
    %v1400 = vadd.f32 %v1300, %v1399
    %v1401 = vpop.f32.mrb[0].mxu0
    %1402 = vmatprep.mubr.f32.mxu0 %v174
    %1403 = vmatmul.mubr.f32.gmra.mrb[0].mxu0 %v173
    %v1404 = vpop.f32.mrb[0].mxu0
    %v1405 = vadd.f32 %v1305, %v1404
    %v1406 = vpop.f32.mrb[0].mxu0
    %1407 = vmatprep.mubr.f32.mxu0 %v184
    %1408 = vmatmul.mubr.f32.gmra.mrb[0].mxu0 %v183
    %v1409 = vpop.f32.mrb[0].mxu0
    %v1410 = vadd.f32 %v1310, %v1409
    %v1411 = vpop.f32.mrb[0].mxu0
    %1412 = vmatprep.mubr.f32.mxu0 %v194
    %1413 = vmatmul.mubr.f32.gmra.mrb[0].mxu0 %v193
    %v1414 = vpop.f32.mrb[0].mxu0
    %v1415 = vadd.f32 %v1315, %v1414
    %v1416 = vpop.f32.mrb[0].mxu0
    %1417 = vmatprep.mubr.f32.mxu0 %v204
    %1418 = vmatmul.mubr.f32.gmra.mrb[0].mxu0 %v203
    %v1419 = vpop.f32.mrb[0].mxu0
    %v1420 = vadd.f32 %v1320, %v1419
    %v1421 = vpop.f32.mrb[0].mxu0
    %1422 = vmatprep.mubr.f32.mxu0 %v214
    %1423 = vmatmul.mubr.f32.gmra.mrb[0].mxu0 %v213
    %v1424 = vpop.f32.mrb[0].mxu0
    %v1425 = vadd.f32 %v1325, %v1424
    %v1426 = vpop.f32.mrb[0].mxu0
    %1427 = vdwg.mxu0
    %1428 = vmatprep.subr.mxu0 0.0
    %1429 = vmatpush1.msra.mxu0 %v415
    %1430 = vmatprep.subr.mxu0 0.0
    %1431 = vmatpush1.msra.mxu0 %v418
    %1432 = vmatprep.subr.mxu0 0.0
    %1433 = vmatpush1.msra.mxu0 %v421
    %1434 = vmatprep.subr.mxu0 0.0
    %1435 = vmatpush1.msra.mxu0 %v424
    %1436 = vmatprep.subr.mxu0 0.0
    %1437 = vmatpush1.msra.mxu0 %v427
    %1438 = vmatprep.subr.mxu0 0.0
    %1439 = vmatpush1.msra.mxu0 %v430
    %1440 = vmatprep.subr.mxu0 0.0
    %1441 = vmatpush1.msra.mxu0 %v433
    %1442 = vmatprep.subr.mxu0 0.0
    %1443 = vmatpush1.msra.mxu0 %v436
    %1444 = vmatprep.subr.mxu0 0.0
    %1445 = vmatpush1.msra.mxu0 %v439
    %1446 = vmatprep.subr.mxu0 0.0
    %1447 = vmatpush1.msra.mxu0 %v442
    %1448 = vmatprep.subr.mxu0 0.0
    %1449 = vmatpush1.msra.mxu0 %v445
    %1450 = vmatprep.subr.mxu0 0.0
    %1451 = vmatpush1.msra.mxu0 %v448
    %1452 = vmatprep.subr.mxu0 0.0
    %1453 = vmatpush1.msra.mxu0 %v451
    %1454 = vmatprep.subr.mxu0 0.0
    %1455 = vmatpush1.msra.mxu0 %v454
    %1456 = vmatprep.subr.mxu0 0.0
    %1457 = vmatpush1.msra.mxu0 %v457
    %1458 = vmatprep.subr.mxu0 0.0
    %1459 = vmatpush1.msra.mxu0 %v460
    %1460 = vmatprep.subr.mxu0 0.0
    %1461 = vmatpush1.msra.mxu0 %v463
    %1462 = vmatprep.subr.mxu0 0.0
    %1463 = vmatpush1.msra.mxu0 %v466
    %1464 = vmatprep.subr.mxu0 0.0
    %1465 = vmatpush1.msra.mxu0 %v469
    %1466 = vmatprep.subr.mxu0 0.0
    %1467 = vmatpush1.msra.mxu0 %v472
    %1468 = vmatprep.subr.mxu0 0.0
    %1469 = vmatpush1.msra.mxu0 %v475
    %1470 = vmatprep.subr.mxu0 0.0
    %1471 = vmatpush1.msra.mxu0 %v478
    %1472 = vmatprep.subr.mxu0 0.0
    %1473 = vmatpush1.msra.mxu0 %v481
    %1474 = vmatprep.subr.mxu0 0.0
    %1475 = vmatpush1.msra.mxu0 %v484
    %1476 = vmatprep.subr.mxu0 0.0
    %1477 = vmatpush1.msra.mxu0 %v487
    %1478 = vmatprep.subr.mxu0 0.0
    %1479 = vmatpush1.msra.mxu0 %v490
    %1480 = vmatprep.subr.mxu0 0.0
    %1481 = vmatpush1.msra.mxu0 %v493
    %1482 = vmatprep.subr.mxu0 0.0
    %1483 = vmatpush1.msra.mxu0 %v496
    %1484 = vmatprep.subr.mxu0 0.0
    %1485 = vmatpush1.msra.mxu0 %v499
    %1486 = vmatprep.subr.mxu0 0.0
    %1487 = vmatpush1.msra.mxu0 %v502
    %1488 = vmatprep.subr.mxu0 0.0
    %1489 = vmatpush1.msra.mxu0 %v505
    %1490 = vmatprep.subr.mxu0 0.0
    %1491 = vmatpush1.msra.mxu0 %v508
    %1492 = vmatprep.mubr.f32.mxu0 %v156
    %1493 = vmatmul.mubr.f32.gmra.mrb[0].mxu0 %v155
    %v1494 = vpop.f32.mrb[0].mxu0
    %v1495 = vadd.f32 %v1395, %v1494
    %v1496 = vpop.f32.mrb[0].mxu0
    %1497 = vmatprep.mubr.f32.mxu0 %v166
    %1498 = vmatmul.mubr.f32.gmra.mrb[0].mxu0 %v165
    %v1499 = vpop.f32.mrb[0].mxu0
    %v1500 = vadd.f32 %v1400, %v1499
    %v1501 = vpop.f32.mrb[0].mxu0
    %1502 = vmatprep.mubr.f32.mxu0 %v176
    %1503 = vmatmul.mubr.f32.gmra.mrb[0].mxu0 %v175
    %v1504 = vpop.f32.mrb[0].mxu0
    %v1505 = vadd.f32 %v1405, %v1504
    %v1506 = vpop.f32.mrb[0].mxu0
    %1507 = vmatprep.mubr.f32.mxu0 %v186
    %1508 = vmatmul.mubr.f32.gmra.mrb[0].mxu0 %v185
    %v1509 = vpop.f32.mrb[0].mxu0
    %v1510 = vadd.f32 %v1410, %v1509
    %v1511 = vpop.f32.mrb[0].mxu0
    %1512 = vmatprep.mubr.f32.mxu0 %v196
    %1513 = vmatmul.mubr.f32.gmra.mrb[0].mxu0 %v195
    %v1514 = vpop.f32.mrb[0].mxu0
    %v1515 = vadd.f32 %v1415, %v1514
    %v1516 = vpop.f32.mrb[0].mxu0
    %1517 = vmatprep.mubr.f32.mxu0 %v206
    %1518 = vmatmul.mubr.f32.gmra.mrb[0].mxu0 %v205
    %v1519 = vpop.f32.mrb[0].mxu0
    %v1520 = vadd.f32 %v1420, %v1519
    %v1521 = vpop.f32.mrb[0].mxu0
    %1522 = vmatprep.mubr.f32.mxu0 %v216
    %1523 = vmatmul.mubr.f32.gmra.mrb[0].mxu0 %v215
    %v1524 = vpop.f32.mrb[0].mxu0
    %v1525 = vadd.f32 %v1425, %v1524
    %v1526 = vpop.f32.mrb[0].mxu0
    %1527 = vdwg.mxu0
    %1528 = vmatprep.subr.mxu0 0.0
    %1529 = vmatpush1.msra.mxu0 %v511
    %1530 = vmatprep.subr.mxu0 0.0
    %1531 = vmatpush1.msra.mxu0 %v514
    %1532 = vmatprep.subr.mxu0 0.0
    %1533 = vmatpush1.msra.mxu0 %v517
    %1534 = vmatprep.subr.mxu0 0.0
    %1535 = vmatpush1.msra.mxu0 %v520
    %1536 = vmatprep.subr.mxu0 0.0
    %1537 = vmatpush1.msra.mxu0 %v523
    %1538 = vmatprep.subr.mxu0 0.0
    %1539 = vmatpush1.msra.mxu0 %v526
    %1540 = vmatprep.subr.mxu0 0.0
    %1541 = vmatpush1.msra.mxu0 %v529
    %1542 = vmatprep.subr.mxu0 0.0
    %1543 = vmatpush1.msra.mxu0 %v532
    %1544 = vmatprep.subr.mxu0 0.0
    %1545 = vmatpush1.msra.mxu0 %v535
    %1546 = vmatprep.subr.mxu0 0.0
    %1547 = vmatpush1.msra.mxu0 %v538
    %1548 = vmatprep.subr.mxu0 0.0
    %1549 = vmatpush1.msra.mxu0 %v541
    %1550 = vmatprep.subr.mxu0 0.0
    %1551 = vmatpush1.msra.mxu0 %v544
    %1552 = vmatprep.subr.mxu0 0.0
    %1553 = vmatpush1.msra.mxu0 %v547
    %1554 = vmatprep.subr.mxu0 0.0
    %1555 = vmatpush1.msra.mxu0 %v550
    %1556 = vmatprep.subr.mxu0 0.0
    %1557 = vmatpush1.msra.mxu0 %v553
    %1558 = vmatprep.subr.mxu0 0.0
    %1559 = vmatpush1.msra.mxu0 %v556
    %1560 = vmatprep.subr.mxu0 0.0
    %1561 = vmatpush1.msra.mxu0 %v559
    %1562 = vmatprep.subr.mxu0 0.0
    %1563 = vmatpush1.msra.mxu0 %v562
    %1564 = vmatprep.subr.mxu0 0.0
    %1565 = vmatpush1.msra.mxu0 %v565
    %1566 = vmatprep.subr.mxu0 0.0
    %1567 = vmatpush1.msra.mxu0 %v568
    %1568 = vmatprep.subr.mxu0 0.0
    %1569 = vmatpush1.msra.mxu0 %v571
    %1570 = vmatprep.subr.mxu0 0.0
    %1571 = vmatpush1.msra.mxu0 %v574
    %1572 = vmatprep.subr.mxu0 0.0
    %1573 = vmatpush1.msra.mxu0 %v577
    %1574 = vmatprep.subr.mxu0 0.0
    %1575 = vmatpush1.msra.mxu0 %v580
    %1576 = vmatprep.subr.mxu0 0.0
    %1577 = vmatpush1.msra.mxu0 %v583
    %1578 = vmatprep.subr.mxu0 0.0
    %1579 = vmatpush1.msra.mxu0 %v586
    %1580 = vmatprep.subr.mxu0 0.0
    %1581 = vmatpush1.msra.mxu0 %v589
    %1582 = vmatprep.subr.mxu0 0.0
    %1583 = vmatpush1.msra.mxu0 %v592
    %1584 = vmatprep.subr.mxu0 0.0
    %1585 = vmatpush1.msra.mxu0 %v595
    %1586 = vmatprep.subr.mxu0 0.0
    %1587 = vmatpush1.msra.mxu0 %v598
    %1588 = vmatprep.subr.mxu0 0.0
    %1589 = vmatpush1.msra.mxu0 %v601
    %1590 = vmatprep.subr.mxu0 0.0
    %1591 = vmatpush1.msra.mxu0 %v604
    %1592 = vmatprep.mubr.f32.mxu0 %v158
    %1593 = vmatmul.mubr.f32.gmra.mrb[0].mxu0 %v157
    %v1594 = vpop.f32.mrb[0].mxu0
    %v1595 = vadd.f32 %v1495, %v1594
    %v1596 = vpop.f32.mrb[0].mxu0
    %1597 = vmatprep.mubr.f32.mxu0 %v168
    %1598 = vmatmul.mubr.f32.gmra.mrb[0].mxu0 %v167
    %v1599 = vpop.f32.mrb[0].mxu0
    %v1600 = vadd.f32 %v1500, %v1599
    %v1601 = vpop.f32.mrb[0].mxu0
    %1602 = vmatprep.mubr.f32.mxu0 %v178
    %1603 = vmatmul.mubr.f32.gmra.mrb[0].mxu0 %v177
    %v1604 = vpop.f32.mrb[0].mxu0
    %v1605 = vadd.f32 %v1505, %v1604
    %v1606 = vpop.f32.mrb[0].mxu0
    %1607 = vmatprep.mubr.f32.mxu0 %v188
    %1608 = vmatmul.mubr.f32.gmra.mrb[0].mxu0 %v187
    %v1609 = vpop.f32.mrb[0].mxu0
    %v1610 = vadd.f32 %v1510, %v1609
    %v1611 = vpop.f32.mrb[0].mxu0
    %1612 = vmatprep.mubr.f32.mxu0 %v198
    %1613 = vmatmul.mubr.f32.gmra.mrb[0].mxu0 %v197
    %v1614 = vpop.f32.mrb[0].mxu0
    %v1615 = vadd.f32 %v1515, %v1614
    %v1616 = vpop.f32.mrb[0].mxu0
    %1617 = vmatprep.mubr.f32.mxu0 %v208
    %1618 = vmatmul.mubr.f32.gmra.mrb[0].mxu0 %v207
    %v1619 = vpop.f32.mrb[0].mxu0
    %v1620 = vadd.f32 %v1520, %v1619
    %v1621 = vpop.f32.mrb[0].mxu0
    %1622 = vmatprep.mubr.f32.mxu0 %v218
    %1623 = vmatmul.mubr.f32.gmra.mrb[0].mxu0 %v217
    %v1624 = vpop.f32.mrb[0].mxu0
    %v1625 = vadd.f32 %v1525, %v1624
    %v1626 = vpop.f32.mrb[0].mxu0
    %1627 = vdwg.mxu0
    %1628 = vmatprep.subr.mxu0 0.0
    %1629 = vmatpush1.msra.mxu0 %v607
    %1630 = vmatprep.subr.mxu0 0.0
    %1631 = vmatpush1.msra.mxu0 %v610
    %1632 = vmatprep.subr.mxu0 0.0
    %1633 = vmatpush1.msra.mxu0 %v613
    %1634 = vmatprep.subr.mxu0 0.0
    %1635 = vmatpush1.msra.mxu0 %v616
    %1636 = vmatprep.subr.mxu0 0.0
    %1637 = vmatpush1.msra.mxu0 %v619
    %1638 = vmatprep.subr.mxu0 0.0
    %1639 = vmatpush1.msra.mxu0 %v622
    %1640 = vmatprep.subr.mxu0 0.0
    %1641 = vmatpush1.msra.mxu0 %v625
    %1642 = vmatprep.subr.mxu0 0.0
    %1643 = vmatpush1.msra.mxu0 %v628
    %1644 = vmatprep.subr.mxu0 0.0
    %1645 = vmatpush1.msra.mxu0 %v631
    %1646 = vmatprep.subr.mxu0 0.0
    %1647 = vmatpush1.msra.mxu0 %v634
    %1648 = vmatprep.subr.mxu0 0.0
    %1649 = vmatpush1.msra.mxu0 %v637
    %1650 = vmatprep.subr.mxu0 0.0
    %1651 = vmatpush1.msra.mxu0 %v640
    %1652 = vmatprep.subr.mxu0 0.0
    %1653 = vmatpush1.msra.mxu0 %v643
    %1654 = vmatprep.subr.mxu0 0.0
    %1655 = vmatpush1.msra.mxu0 %v646
    %1656 = vmatprep.subr.mxu0 0.0
    %1657 = vmatpush1.msra.mxu0 %v649
    %1658 = vmatprep.subr.mxu0 0.0
    %1659 = vmatpush1.msra.mxu0 %v652
    %1660 = vmatprep.subr.mxu0 0.0
    %1661 = vmatpush1.msra.mxu0 %v655
    %1662 = vmatprep.subr.mxu0 0.0
    %1663 = vmatpush1.msra.mxu0 %v658
    %1664 = vmatprep.subr.mxu0 0.0
    %1665 = vmatpush1.msra.mxu0 %v661
    %1666 = vmatprep.subr.mxu0 0.0
    %1667 = vmatpush1.msra.mxu0 %v664
    %1668 = vmatprep.subr.mxu0 0.0
    %1669 = vmatpush1.msra.mxu0 %v667
    %1670 = vmatprep.subr.mxu0 0.0
    %1671 = vmatpush1.msra.mxu0 %v670
    %1672 = vmatprep.subr.mxu0 0.0
    %1673 = vmatpush1.msra.mxu0 0.0
    %1674 = vmatprep.subr.mxu0 0.0
    %1675 = vmatpush1.msra.mxu0 0.0
    %1676 = vmatprep.subr.mxu0 0.0
    %1677 = vmatpush1.msra.mxu0 0.0
    %1678 = vmatprep.subr.mxu0 0.0
    %1679 = vmatpush1.msra.mxu0 0.0
    %1680 = vmatprep.subr.mxu0 0.0
    %1681 = vmatpush1.msra.mxu0 0.0
    %1682 = vmatprep.subr.mxu0 0.0
    %1683 = vmatpush1.msra.mxu0 0.0
    %1684 = vmatprep.subr.mxu0 0.0
    %1685 = vmatpush1.msra.mxu0 0.0
    %1686 = vmatprep.subr.mxu0 0.0
    %1687 = vmatpush1.msra.mxu0 0.0
    %1688 = vmatprep.subr.mxu0 0.0
    %1689 = vmatpush1.msra.mxu0 0.0
    %1690 = vmatprep.subr.mxu0 0.0
    %1691 = vmatpush1.msra.mxu0 0.0
    %1692 = vmatprep.mubr.f32.mxu0 %v673
    %1693 = vmatmul.mubr.f32.gmra.mrb[0].mxu0 %v159
    %v1694 = vpop.f32.mrb[0].mxu0
    %v1695 = vadd.f32 %v1595, %v1694
    %v1696 = vpop.f32.mrb[0].mxu0
    %1697 = vmatprep.mubr.f32.mxu0 %v676
    %1698 = vmatmul.mubr.f32.gmra.mrb[0].mxu0 %v169
    %v1699 = vpop.f32.mrb[0].mxu0
    %v1700 = vadd.f32 %v1600, %v1699
    %v1701 = vpop.f32.mrb[0].mxu0
    %1702 = vmatprep.mubr.f32.mxu0 %v679
    %1703 = vmatmul.mubr.f32.gmra.mrb[0].mxu0 %v179
    %v1704 = vpop.f32.mrb[0].mxu0
    %v1705 = vadd.f32 %v1605, %v1704
    %v1706 = vpop.f32.mrb[0].mxu0
    %1707 = vmatprep.mubr.f32.mxu0 %v682
    %1708 = vmatmul.mubr.f32.gmra.mrb[0].mxu0 %v189
    %v1709 = vpop.f32.mrb[0].mxu0
    %v1710 = vadd.f32 %v1610, %v1709
    %v1711 = vpop.f32.mrb[0].mxu0
    %1712 = vmatprep.mubr.f32.mxu0 %v685
    %1713 = vmatmul.mubr.f32.gmra.mrb[0].mxu0 %v199
    %v1714 = vpop.f32.mrb[0].mxu0
    %v1715 = vadd.f32 %v1615, %v1714
    %v1716 = vpop.f32.mrb[0].mxu0
    %1717 = vmatprep.mubr.f32.mxu0 %v688
    %1718 = vmatmul.mubr.f32.gmra.mrb[0].mxu0 %v209
    %v1719 = vpop.f32.mrb[0].mxu0
    %v1720 = vadd.f32 %v1620, %v1719
    %v1721 = vpop.f32.mrb[0].mxu0
    %1722 = vmatprep.mubr.f32.mxu0 %v691
    %1723 = vmatmul.mubr.f32.gmra.mrb[0].mxu0 %v219
    %v1724 = vpop.f32.mrb[0].mxu0
    %v1725 = vadd.f32 %v1625, %v1724
    %v1726 = vpop.f32.mrb[0].mxu0
    %1727 = vdwg.mxu0
    %1728 = vst [vmem:[#allocation2] sm:$0xff] %v1188
    %1729 = vst [vmem:[#allocation2 + $0x8] sm:$0xff] %v1190
    %vm1730 = vcmask 719872
    %1731 = vst.msk [vmem:[#allocation2 + $0x10] sm:$0xff] %vm1730, %v1695
    %1732 = vst [vmem:[#allocation2 + $0x18] sm:$0xff] %v1194
    %1733 = vst [vmem:[#allocation2 + $0x20] sm:$0xff] %v1196
    %1734 = vst.msk [vmem:[#allocation2 + $0x28] sm:$0xff] %vm1730, %v1700
    %1735 = vst [vmem:[#allocation2 + $0x30] sm:$0xff] %v1200
    %1736 = vst [vmem:[#allocation2 + $0x38] sm:$0xff] %v1202
    %1737 = vst.msk [vmem:[#allocation2 + $0x40] sm:$0xff] %vm1730, %v1705
    %1738 = vst [vmem:[#allocation2 + $0x48] sm:$0xff] %v1206
    %1739 = vst [vmem:[#allocation2 + $0x50] sm:$0xff] %v1208
    %1740 = vst.msk [vmem:[#allocation2 + $0x58] sm:$0xff] %vm1730, %v1710
    %1741 = vst [vmem:[#allocation2 + $0x60] sm:$0xff] %v1212
    %1742 = vst [vmem:[#allocation2 + $0x68] sm:$0xff] %v1214
    %1743 = vst.msk [vmem:[#allocation2 + $0x70] sm:$0xff] %vm1730, %v1715
    %1744 = vst [vmem:[#allocation2 + $0x78] sm:$0xff] %v1218
    %1745 = vst [vmem:[#allocation2 + $0x80] sm:$0xff] %v1220
    %1746 = vst.msk [vmem:[#allocation2 + $0x88] sm:$0xff] %vm1730, %v1720
    %1747 = vst [vmem:[#allocation2 + $0x90] sm:$0x1] %v1224
    %1748 = vst [vmem:[#allocation2 + $0x98] sm:$0x1] %v1226
    %vm1749 = vcmask 712704
    %1750 = vst.msk [vmem:[#allocation2 + $0xa0] sm:$0x1] %vm1749, %v1725
    // Predicated region
    $region14: #{tpu_custom_call.1} parent=1 // pred_check
      _
    $region15: #{tpu_custom_call.1} parent=1 // pred_check_branch
      %1752 = sbr.rel (0) target = $region17
    $region16: #{tpu_custom_call.1} parent=1 // pred_region
      %s1754 = ssub.s32 2688, 2688
      %1755 = vsyncadd [#allocation3], %s1754
      %s1756 = sshll.u32 [#allocation2], 4
      %s1757 = int_to_ptr.vmem [resolvable:$true] %s1756
      %1762 = dma.vmem_to_hbm [thread:$0]  %s1757, 2688, %s3, [#allocation3], 384, 384, 24
    $region17: #{tpu_custom_call.1} parent=1 // pred_fallthru
      _
    // Predicated region
    $region18: #{tpu_custom_call.1} parent=1 // pred_check
      _
    $region19: #{tpu_custom_call.1} parent=1 // pred_check_branch
      %1764 = sbr.rel (0) target = $region21
    $region20: #{tpu_custom_call.1} parent=1 // pred_region
      %1765 = dma.done [#allocation3], 2688
    $region21: #{tpu_custom_call.1} parent=1 // pred_fallthru
      _
    %1766 = vsyncpa [#allocation3], 1

</llo_original>
